<compile_context>
chip_gen: v7x
topology: tpu7x:2x2x1
jax: 0.10.0
libtpu: 0.0.40
codegen_flags: <defaults>
</compile_context>

<pallas_src>
import functools

import jax
import jax.numpy as jnp
from jax.experimental import pallas as pl
from jax.experimental.pallas import tpu as pltpu

EPS = 1e-5  # nn.GroupNorm default eps


def _round_up(x, m):
    return ((x + m - 1) // m) * m


def _conv_stats_kernel(xmain_ref, xhalo_ref, w_ref, b_ref, mask_ref,
                       conv_ref, stats_ref, xwin_ref, xstack_ref, *,
                       tile, halo, offsets, cin_p):
    """Phase 1: conv3x3x3 + bias for one lane tile, plus GN partial statistics.

    xmain_ref  : (1, Cin_p, tile)      bf16 input tile   (auto-pipelined)
    xhalo_ref  : (1, Cin_p, halo)      bf16 halo block   (auto-pipelined)
    w_ref      : (Cout, k^3*Cin_p)     bf16 fused per-tap weights (resident)
    b_ref      : (Cout, 1)             f32 bias
    mask_ref   : (1, tile)             f32 validity mask (1 where real output)
    conv_ref   : (1, Cout, tile)       bf16 conv+bias output (lane-dense)
    stats_ref  : (1, 1, 8, 128)        f32; rows 0/1/2 = sum / ssd / count
    xwin_ref   : (Cin_p, tile + halo)  bf16 scratch: contiguous halo'd window
    xstack_ref : (k^3*Cin_p, tile)     bf16 scratch: stacked matmul operand
    """
    # Assemble the halo'd window in VMEM (both pieces are lane-aligned copies).
    xwin_ref[:, pl.ds(0, tile)] = xmain_ref[0]
    xwin_ref[:, pl.ds(tile, halo)] = xhalo_ref[0]

    # Stack the k^3 lane-shifted slices -> a single deep-K MXU matmul instead of
    # 27 shallow K=Cin dots (accumulation stays inside the MXU).
    for idx, off in enumerate(offsets):
        xstack_ref[pl.ds(idx * cin_p, cin_p), :] = xwin_ref[:, pl.ds(off, tile)]

    conv = jnp.dot(w_ref[...], xstack_ref[...],
                   preferred_element_type=jnp.float32)            # (Cout, tile) f32
    conv = conv + b_ref[...]
    conv_ref[0] = conv.astype(conv_ref.dtype)                     # bf16 intermediate

    # Per-tile GroupNorm partials computed on the f32 accumulator, using a
    # per-tile mean (two-pass within the tile); combined across tiles with
    # Chan's parallel-variance formula in the wrapper.
    m = mask_ref[...]                                             # (1, tile) 0/1
    cout = conv.shape[0]
    s = jnp.sum(conv * m)
    cnt = jnp.sum(m) * cout
    mu = jnp.where(cnt > 0.0, s / jnp.maximum(cnt, 1.0), 0.0)
    d = conv - mu
    ssd = jnp.sum(d * d * m)

    row = jax.lax.broadcasted_iota(jnp.int32, (8, 128), 0)
    stats_ref[0, 0] = jnp.where(row == 0, s,
                      jnp.where(row == 1, ssd,
                      jnp.where(row == 2, cnt, 0.0)))


def _affine_relu_kernel(conv_ref, scale_ref, shift_ref, out_ref):
    """Phase 2: pure elementwise GN affine + ReLU (fully auto-pipelined)."""
    y = conv_ref[0].astype(jnp.float32) * scale_ref[0] + shift_ref[0]
    out_ref[0] = jnp.maximum(y, 0.0)


def conv_gn_relu3(x_ncdhw, weight, bias, gamma, beta, *,
                  ksize=3, stride=1, padding=1, tile_lanes=4096,
                  vmem_budget_bytes=40 * 1024 * 1024):
    """Forward of ConvGnRelu3. x_ncdhw: [N, C_in, D, H, W] (PyTorch layout)."""
    assert stride == 1, "this kernel implements stride=1"
    N, Cin, D, H, W = x_ncdhw.shape
    Cout = weight.shape[0]
    k = ksize

    Dp, Hp, Wp = D + 2 * padding, H + 2 * padding, W + 2 * padding
    Do, Ho, Wo = Dp - k + 1, Hp - k + 1, Wp - k + 1

    # Tap lane-offsets in the flat padded spatial layout ((kd, kh, kw) order,
    # matching the fused weight layout below); ascending, last == halo extent.
    offsets = tuple(kd * Hp * Wp + kh * Wp + kw
                    for kd in range(k) for kh in range(k) for kw in range(k))
    offmax = offsets[-1]

    Cin_p = _round_up(Cin, 16)            # bf16 sublane packing for the stack
    Kp = k ** 3 * Cin_p

    # Halo-aware lane tiling: the halo is its own (auto-pipelined) block, tile is
    # a multiple of it.  Shrink tile if the double-buffered blocks + stacked
    # operand would blow the VMEM budget (v7x: 64 MiB physical).
    halo = _round_up(offmax, 128)
    Lout = Do * Hp * Wp

    def vmem_bytes(t):
        return (2 * Cin_p * t * 2 + 2 * Cin_p * halo * 2      # x main / halo blocks
                + Cout * Kp * 2 + Cout * 4                    # weights + bias
                + 2 * t * 4                                   # mask blocks
                + 2 * Cout * t * 2 + 2 * 8 * 128 * 4          # conv + stats blocks
                + Cin_p * (t + halo) * 2 + Kp * t * 2)        # xwin + xstack scratch

    n_halo = max(1, min(tile_lanes // halo, _round_up(Lout, halo) // halo))
    while n_halo > 1 and vmem_bytes(n_halo * halo) > vmem_budget_bytes:
        n_halo -= 1
    tile = n_halo * halo
    T = pl.cdiv(Lout, tile)
    Lpad = T * tile
    Lext = Lpad + tile                    # multiple of both tile and halo
    tph = tile // halo

    # ---- glue: bf16 transport, pad channels to Cin_p, spatial + lane tail ----
    xp = jnp.pad(x_ncdhw.astype(jnp.bfloat16),
                 ((0, 0), (0, Cin_p - Cin), (padding, padding),
                  (padding, padding), (padding, padding)))
    x_ext = jnp.pad(xp.reshape(N, Cin_p, Dp * Hp * Wp),
                    ((0, 0), (0, 0), (0, Lext - Dp * Hp * Wp)))

    # Fused weight: W_big[:, idx*Cin_p:(idx+1)*Cin_p] == weight[:, :, kd, kh, kw].
    w_taps = jnp.transpose(weight, (2, 3, 4, 0, 1)).reshape(k ** 3, Cout, Cin)
    w_taps = jnp.pad(w_taps, ((0, 0), (0, 0), (0, Cin_p - Cin)))
    w_big = jnp.transpose(w_taps, (1, 0, 2)).reshape(Cout, Kp).astype(jnp.bfloat16)
    b2 = bias.reshape(Cout, 1).astype(jnp.float32)

    # Validity mask over the flat padded layout (1 where (d,h,w) is a real output).
    p = jnp.arange(Lpad, dtype=jnp.int32)
    valid = ((p // (Hp * Wp) < Do) & ((p // Wp) % Hp < Ho) & (p % Wp < Wo))
    mask = valid.astype(jnp.float32).reshape(1, Lpad)

    limit = max(32 * 1024 * 1024, min(int(1.25 * vmem_bytes(tile)), 48 * 1024 * 1024))
    cparams = pltpu.CompilerParams(
        dimension_semantics=("parallel", "parallel"),   # both axes megacore-splittable
        vmem_limit_bytes=limit)

    kern1 = functools.partial(_conv_stats_kernel, tile=tile, halo=halo,
                              offsets=offsets, cin_p=Cin_p)

    # ---- phase 1: conv + bias per tile (bf16 out) + per-tile GN partials ----
    conv_bf, stats = pl.pallas_call(
        kern1,
        grid=(N, T),
        in_specs=[
            pl.BlockSpec((1, Cin_p, tile), lambda n, t: (n, 0, t)),
            pl.BlockSpec((1, Cin_p, halo), lambda n, t: (n, 0, (t + 1) * tph)),
            pl.BlockSpec((Cout, Kp), lambda n, t: (0, 0)),
            pl.BlockSpec((Cout, 1), lambda n, t: (0, 0)),
            pl.BlockSpec((1, tile), lambda n, t: (0, t)),
        ],
        out_specs=(
            pl.BlockSpec((1, Cout, tile), lambda n, t: (n, 0, t)),
            pl.BlockSpec((1, 1, 8, 128), lambda n, t: (n, t, 0, 0)),
        ),
        out_shape=(jax.ShapeDtypeStruct((N, Cout, Lpad), jnp.bfloat16),
                   jax.ShapeDtypeStruct((N, T, 8, 128), jnp.float32)),
        scratch_shapes=[pltpu.VMEM((Cin_p, tile + halo), jnp.bfloat16),
                        pltpu.VMEM((Kp, tile), jnp.bfloat16)],
        compiler_params=cparams,
    )(x_ext, x_ext, w_big, b2, mask)

    # ---- tiny glue: Chan's parallel-variance combine -> per-sample GN affine ----
    sums = stats[:, :, 0, 0]                                  # (N, T)
    ssds = stats[:, :, 1, 0]
    cnts = stats[:, :, 2, 0]
    tot_n = jnp.sum(cnts, axis=1)
    mean = jnp.sum(sums, axis=1) / tot_n
    mean_t = jnp.where(cnts > 0, sums / jnp.maximum(cnts, 1.0), 0.0)
    m2 = jnp.sum(ssds + cnts * jnp.square(mean_t - mean[:, None]), axis=1)
    var = m2 / tot_n                                          # biased var (PyTorch GN)
    rstd = jax.lax.rsqrt(var + EPS)
    scale = gamma[None, :].astype(jnp.float32) * rstd[:, None]      # (N, Cout)
    shift = beta[None, :].astype(jnp.float32) - mean[:, None] * scale
    scale = scale.reshape(N, Cout, 1)
    shift = shift.reshape(N, Cout, 1)

    # ---- phase 2: elementwise normalize + affine + ReLU on the stored conv ----
    out_pad = pl.pallas_call(
        _affine_relu_kernel,
        grid=(N, T),
        in_specs=[
            pl.BlockSpec((1, Cout, tile), lambda n, t: (n, 0, t)),
            pl.BlockSpec((1, Cout, 1), lambda n, t: (n, 0, 0)),
            pl.BlockSpec((1, Cout, 1), lambda n, t: (n, 0, 0)),
        ],
        out_specs=pl.BlockSpec((1, Cout, tile), lambda n, t: (n, 0, t)),
        out_shape=jax.ShapeDtypeStruct((N, Cout, Lpad), jnp.float32),
        compiler_params=cparams,
    )(conv_bf, scale, shift)

    # ---- glue: un-flatten the padded layout, drop pad rows -> NCDHW ----
    out = out_pad[:, :, :Do * Hp * Wp].reshape(N, Cout, Do, Hp, Wp)
    return out[:, :, :, :Ho, :Wo]


def reference_forward(x_ncdhw, weight, bias, gamma, beta, *, padding=1):
    """Pure-JAX reference matching PyTorch semantics (for verification)."""
    conv = jax.lax.conv_general_dilated(
        x_ncdhw, weight, window_strides=(1, 1, 1),
        padding=((padding, padding),) * 3,
        dimension_numbers=("NCDHW", "OIDHW", "NCDHW"),
        precision=jax.lax.Precision.HIGHEST)
    conv = conv + bias[None, :, None, None, None]
    mean = conv.mean(axis=(1, 2, 3, 4), keepdims=True)
    var = ((conv - mean) ** 2).mean(axis=(1, 2, 3, 4), keepdims=True)
    y = (conv - mean) * jax.lax.rsqrt(var + EPS)
    y = y * gamma[None, :, None, None, None] + beta[None, :, None, None, None]
    return jnp.maximum(y, 0.0)


if __name__ == "__main__":
    # Small shapes consistent with the module: ConvGnRelu3(in=4, out=8, k=3, s=1, p=1)
    N, Cin, Cout, D, H, W, K = 2, 4, 8, 8, 8, 8, 3

    key = jax.random.PRNGKey(0)
    kx, kw, kb, kg, kbt = jax.random.split(key, 5)
    x = jax.random.normal(kx, (N, Cin, D, H, W), dtype=jnp.float32)
    weight = 0.1 * jax.random.normal(kw, (Cout, Cin, K, K, K), dtype=jnp.float32)
    bias = 0.1 * jax.random.normal(kb, (Cout,), dtype=jnp.float32)
    gamma = 1.0 + 0.1 * jax.random.normal(kg, (Cout,), dtype=jnp.float32)
    beta = 0.1 * jax.random.normal(kbt, (Cout,), dtype=jnp.float32)

    ref = jax.block_until_ready(
        reference_forward(x, weight, bias, gamma, beta, padding=1))

    # Multi-tile path (tile == halo == 256 lanes -> 4 spatial tiles).
    out = jax.block_until_ready(
        conv_gn_relu3(x, weight, bias, gamma, beta,
                      ksize=K, stride=1, padding=1, tile_lanes=256))
    assert out.shape == ref.shape, out.shape
    err = float(jnp.max(jnp.abs(out - ref)))
    # bf16 transport + default-precision MXU vs. f32 HIGHEST reference.
    assert jnp.allclose(out, ref, atol=5e-2, rtol=5e-2), err

    # Single-tile path (tile = 1024 lanes covers the whole 8^3 volume).
    out1 = jax.block_until_ready(
        conv_gn_relu3(x, weight, bias, gamma, beta,
                      ksize=K, stride=1, padding=1, tile_lanes=1024))
    err1 = float(jnp.max(jnp.abs(out1 - ref)))
    assert jnp.allclose(out1, ref, atol=5e-2, rtol=5e-2), err1

    print("KERNEL_OK")
</pallas_src>

<mosaic_0001>
module attributes {stable_mosaic.version = 11 : i64} {
  func.func @_conv_stats_kernel(%arg0: i32, %arg1: i32, %arg2: memref<1x16x256xbf16, #tpu.memory_space<vmem>>, %arg3: memref<1x16x256xbf16, #tpu.memory_space<vmem>>, %arg4: memref<8x432xbf16, #tpu.memory_space<vmem>>, %arg5: memref<8x1xf32, #tpu.memory_space<vmem>>, %arg6: memref<1x256xf32, #tpu.memory_space<vmem>>, %arg7: memref<1x8x256xbf16, #tpu.memory_space<vmem>>, %arg8: memref<1x1x8x128xf32, #tpu.memory_space<vmem>>, %arg9: memref<16x512xbf16, #tpu.memory_space<vmem>>, %arg10: memref<432x256xbf16, #tpu.memory_space<vmem>>) attributes {dimension_semantics = [#tpu.dimension_semantics<parallel>, #tpu.dimension_semantics<parallel>], iteration_bounds = array<i64: 2, 4>, scalar_prefetch = 0 : i64, scratch_operands = 2 : i64, tpu.core_type = #tpu.core_type<tc>, window_params = [{transform_indices = @transform_0, window_bounds = array<i64: 1, 16, 256>}, {transform_indices = @transform_1, window_bounds = array<i64: 1, 16, 256>}, {pipeline_mode = #tpu.pipeline_mode<synchronous>, transform_indices = @transform_2, window_bounds = array<i64: 8, 432>}, {pipeline_mode = #tpu.pipeline_mode<synchronous>, transform_indices = @transform_3, window_bounds = array<i64: 8, 1>}, {transform_indices = @transform_4, window_bounds = array<i64: 1, 256>}, {transform_indices = @transform_5, window_bounds = array<i64: 1, 8, 256>}, {transform_indices = @transform_6, window_bounds = array<i64: 1, 1, 8, 128>}]} {
    %c0 = arith.constant 0 : index
    %c0_0 = arith.constant 0 : index
    %c0_1 = arith.constant 0 : index
    %0 = vector.load %arg2[%c0, %c0_0, %c0_1] : memref<1x16x256xbf16, #tpu.memory_space<vmem>>, vector<1x16x256xbf16>
    %1 = vector.shape_cast %0 : vector<1x16x256xbf16> to vector<16x256xbf16>
    %c0_2 = arith.constant 0 : index
    %c0_3 = arith.constant 0 : index
    %2 = vector.load %arg9[%c0_2, %c0_3] : memref<16x512xbf16, #tpu.memory_space<vmem>>, vector<16x256xbf16>
    tpu.vector_store %arg9[%c0_2, %c0_3], %1 {strides = array<i32>} : memref<16x512xbf16, #tpu.memory_space<vmem>>, vector<16x256xbf16>,
    %c0_4 = arith.constant 0 : index
    %c0_5 = arith.constant 0 : index
    %c0_6 = arith.constant 0 : index
    %3 = vector.load %arg3[%c0_4, %c0_5, %c0_6] : memref<1x16x256xbf16, #tpu.memory_space<vmem>>, vector<1x16x256xbf16>
    %4 = vector.shape_cast %3 : vector<1x16x256xbf16> to vector<16x256xbf16>
    %c0_7 = arith.constant 0 : index
    %c256 = arith.constant 256 : index
    %5 = vector.load %arg9[%c0_7, %c256] : memref<16x512xbf16, #tpu.memory_space<vmem>>, vector<16x256xbf16>
    tpu.vector_store %arg9[%c0_7, %c256], %4 {strides = array<i32>} : memref<16x512xbf16, #tpu.memory_space<vmem>>, vector<16x256xbf16>,
    %c0_8 = arith.constant 0 : index
    %c0_9 = arith.constant 0 : index
    %6 = vector.load %arg9[%c0_8, %c0_9] : memref<16x512xbf16, #tpu.memory_space<vmem>>, vector<16x256xbf16>
    %c0_10 = arith.constant 0 : index
    %c0_11 = arith.constant 0 : index
    %7 = vector.load %arg10[%c0_10, %c0_11] : memref<432x256xbf16, #tpu.memory_space<vmem>>, vector<16x256xbf16>
    tpu.vector_store %arg10[%c0_10, %c0_11], %6 {strides = array<i32>} : memref<432x256xbf16, #tpu.memory_space<vmem>>, vector<16x256xbf16>,
    %c0_12 = arith.constant 0 : index
    %c1 = arith.constant 1 : index
    %8 = vector.load %arg9[%c0_12, %c1] : memref<16x512xbf16, #tpu.memory_space<vmem>>, vector<16x256xbf16>
    %c16 = arith.constant 16 : index
    %c0_13 = arith.constant 0 : index
    %9 = vector.load %arg10[%c16, %c0_13] : memref<432x256xbf16, #tpu.memory_space<vmem>>, vector<16x256xbf16>
    tpu.vector_store %arg10[%c16, %c0_13], %8 {strides = array<i32>} : memref<432x256xbf16, #tpu.memory_space<vmem>>, vector<16x256xbf16>,
    %c0_14 = arith.constant 0 : index
    %c2 = arith.constant 2 : index
    %10 = vector.load %arg9[%c0_14, %c2] : memref<16x512xbf16, #tpu.memory_space<vmem>>, vector<16x256xbf16>
    %c32 = arith.constant 32 : index
    %c0_15 = arith.constant 0 : index
    %11 = vector.load %arg10[%c32, %c0_15] : memref<432x256xbf16, #tpu.memory_space<vmem>>, vector<16x256xbf16>
    tpu.vector_store %arg10[%c32, %c0_15], %10 {strides = array<i32>} : memref<432x256xbf16, #tpu.memory_space<vmem>>, vector<16x256xbf16>,
    %c0_16 = arith.constant 0 : index
    %c10 = arith.constant 10 : index
    %12 = vector.load %arg9[%c0_16, %c10] : memref<16x512xbf16, #tpu.memory_space<vmem>>, vector<16x256xbf16>
    %c48 = arith.constant 48 : index
    %c0_17 = arith.constant 0 : index
    %13 = vector.load %arg10[%c48, %c0_17] : memref<432x256xbf16, #tpu.memory_space<vmem>>, vector<16x256xbf16>
    tpu.vector_store %arg10[%c48, %c0_17], %12 {strides = array<i32>} : memref<432x256xbf16, #tpu.memory_space<vmem>>, vector<16x256xbf16>,
    %c0_18 = arith.constant 0 : index
    %c11 = arith.constant 11 : index
    %14 = vector.load %arg9[%c0_18, %c11] : memref<16x512xbf16, #tpu.memory_space<vmem>>, vector<16x256xbf16>
    %c64 = arith.constant 64 : index
    %c0_19 = arith.constant 0 : index
    %15 = vector.load %arg10[%c64, %c0_19] : memref<432x256xbf16, #tpu.memory_space<vmem>>, vector<16x256xbf16>
    tpu.vector_store %arg10[%c64, %c0_19], %14 {strides = array<i32>} : memref<432x256xbf16, #tpu.memory_space<vmem>>, vector<16x256xbf16>,
    %c0_20 = arith.constant 0 : index
    %c12 = arith.constant 12 : index
    %16 = vector.load %arg9[%c0_20, %c12] : memref<16x512xbf16, #tpu.memory_space<vmem>>, vector<16x256xbf16>
    %c80 = arith.constant 80 : index
    %c0_21 = arith.constant 0 : index
    %17 = vector.load %arg10[%c80, %c0_21] : memref<432x256xbf16, #tpu.memory_space<vmem>>, vector<16x256xbf16>
    tpu.vector_store %arg10[%c80, %c0_21], %16 {strides = array<i32>} : memref<432x256xbf16, #tpu.memory_space<vmem>>, vector<16x256xbf16>,
    %c0_22 = arith.constant 0 : index
    %c20 = arith.constant 20 : index
    %18 = vector.load %arg9[%c0_22, %c20] : memref<16x512xbf16, #tpu.memory_space<vmem>>, vector<16x256xbf16>
    %c96 = arith.constant 96 : index
    %c0_23 = arith.constant 0 : index
    %19 = vector.load %arg10[%c96, %c0_23] : memref<432x256xbf16, #tpu.memory_space<vmem>>, vector<16x256xbf16>
    tpu.vector_store %arg10[%c96, %c0_23], %18 {strides = array<i32>} : memref<432x256xbf16, #tpu.memory_space<vmem>>, vector<16x256xbf16>,
    %c0_24 = arith.constant 0 : index
    %c21 = arith.constant 21 : index
    %20 = vector.load %arg9[%c0_24, %c21] : memref<16x512xbf16, #tpu.memory_space<vmem>>, vector<16x256xbf16>
    %c112 = arith.constant 112 : index
    %c0_25 = arith.constant 0 : index
    %21 = vector.load %arg10[%c112, %c0_25] : memref<432x256xbf16, #tpu.memory_space<vmem>>, vector<16x256xbf16>
    tpu.vector_store %arg10[%c112, %c0_25], %20 {strides = array<i32>} : memref<432x256xbf16, #tpu.memory_space<vmem>>, vector<16x256xbf16>,
    %c0_26 = arith.constant 0 : index
    %c22 = arith.constant 22 : index
    %22 = vector.load %arg9[%c0_26, %c22] : memref<16x512xbf16, #tpu.memory_space<vmem>>, vector<16x256xbf16>
    %c128 = arith.constant 128 : index
    %c0_27 = arith.constant 0 : index
    %23 = vector.load %arg10[%c128, %c0_27] : memref<432x256xbf16, #tpu.memory_space<vmem>>, vector<16x256xbf16>
    tpu.vector_store %arg10[%c128, %c0_27], %22 {strides = array<i32>} : memref<432x256xbf16, #tpu.memory_space<vmem>>, vector<16x256xbf16>,
    %c0_28 = arith.constant 0 : index
    %c100 = arith.constant 100 : index
    %24 = vector.load %arg9[%c0_28, %c100] : memref<16x512xbf16, #tpu.memory_space<vmem>>, vector<16x256xbf16>
    %c144 = arith.constant 144 : index
    %c0_29 = arith.constant 0 : index
    %25 = vector.load %arg10[%c144, %c0_29] : memref<432x256xbf16, #tpu.memory_space<vmem>>, vector<16x256xbf16>
    tpu.vector_store %arg10[%c144, %c0_29], %24 {strides = array<i32>} : memref<432x256xbf16, #tpu.memory_space<vmem>>, vector<16x256xbf16>,
    %c0_30 = arith.constant 0 : index
    %c101 = arith.constant 101 : index
    %26 = vector.load %arg9[%c0_30, %c101] : memref<16x512xbf16, #tpu.memory_space<vmem>>, vector<16x256xbf16>
    %c160 = arith.constant 160 : index
    %c0_31 = arith.constant 0 : index
    %27 = vector.load %arg10[%c160, %c0_31] : memref<432x256xbf16, #tpu.memory_space<vmem>>, vector<16x256xbf16>
    tpu.vector_store %arg10[%c160, %c0_31], %26 {strides = array<i32>} : memref<432x256xbf16, #tpu.memory_space<vmem>>, vector<16x256xbf16>,
    %c0_32 = arith.constant 0 : index
    %c102 = arith.constant 102 : index
    %28 = vector.load %arg9[%c0_32, %c102] : memref<16x512xbf16, #tpu.memory_space<vmem>>, vector<16x256xbf16>
    %c176 = arith.constant 176 : index
    %c0_33 = arith.constant 0 : index
    %29 = vector.load %arg10[%c176, %c0_33] : memref<432x256xbf16, #tpu.memory_space<vmem>>, vector<16x256xbf16>
    tpu.vector_store %arg10[%c176, %c0_33], %28 {strides = array<i32>} : memref<432x256xbf16, #tpu.memory_space<vmem>>, vector<16x256xbf16>,
    %c0_34 = arith.constant 0 : index
    %c110 = arith.constant 110 : index
    %30 = vector.load %arg9[%c0_34, %c110] : memref<16x512xbf16, #tpu.memory_space<vmem>>, vector<16x256xbf16>
    %c192 = arith.constant 192 : index
    %c0_35 = arith.constant 0 : index
    %31 = vector.load %arg10[%c192, %c0_35] : memref<432x256xbf16, #tpu.memory_space<vmem>>, vector<16x256xbf16>
    tpu.vector_store %arg10[%c192, %c0_35], %30 {strides = array<i32>} : memref<432x256xbf16, #tpu.memory_space<vmem>>, vector<16x256xbf16>,
    %c0_36 = arith.constant 0 : index
    %c111 = arith.constant 111 : index
    %32 = vector.load %arg9[%c0_36, %c111] : memref<16x512xbf16, #tpu.memory_space<vmem>>, vector<16x256xbf16>
    %c208 = arith.constant 208 : index
    %c0_37 = arith.constant 0 : index
    %33 = vector.load %arg10[%c208, %c0_37] : memref<432x256xbf16, #tpu.memory_space<vmem>>, vector<16x256xbf16>
    tpu.vector_store %arg10[%c208, %c0_37], %32 {strides = array<i32>} : memref<432x256xbf16, #tpu.memory_space<vmem>>, vector<16x256xbf16>,
    %c0_38 = arith.constant 0 : index
    %c112_39 = arith.constant 112 : index
    %34 = vector.load %arg9[%c0_38, %c112_39] : memref<16x512xbf16, #tpu.memory_space<vmem>>, vector<16x256xbf16>
    %c224 = arith.constant 224 : index
    %c0_40 = arith.constant 0 : index
    %35 = vector.load %arg10[%c224, %c0_40] : memref<432x256xbf16, #tpu.memory_space<vmem>>, vector<16x256xbf16>
    tpu.vector_store %arg10[%c224, %c0_40], %34 {strides = array<i32>} : memref<432x256xbf16, #tpu.memory_space<vmem>>, vector<16x256xbf16>,
    %c0_41 = arith.constant 0 : index
    %c120 = arith.constant 120 : index
    %36 = vector.load %arg9[%c0_41, %c120] : memref<16x512xbf16, #tpu.memory_space<vmem>>, vector<16x256xbf16>
    %c240 = arith.constant 240 : index
    %c0_42 = arith.constant 0 : index
    %37 = vector.load %arg10[%c240, %c0_42] : memref<432x256xbf16, #tpu.memory_space<vmem>>, vector<16x256xbf16>
    tpu.vector_store %arg10[%c240, %c0_42], %36 {strides = array<i32>} : memref<432x256xbf16, #tpu.memory_space<vmem>>, vector<16x256xbf16>,
    %c0_43 = arith.constant 0 : index
    %c121 = arith.constant 121 : index
    %38 = vector.load %arg9[%c0_43, %c121] : memref<16x512xbf16, #tpu.memory_space<vmem>>, vector<16x256xbf16>
    %c256_44 = arith.constant 256 : index
    %c0_45 = arith.constant 0 : index
    %39 = vector.load %arg10[%c256_44, %c0_45] : memref<432x256xbf16, #tpu.memory_space<vmem>>, vector<16x256xbf16>
    tpu.vector_store %arg10[%c256_44, %c0_45], %38 {strides = array<i32>} : memref<432x256xbf16, #tpu.memory_space<vmem>>, vector<16x256xbf16>,
    %c0_46 = arith.constant 0 : index
    %c122 = arith.constant 122 : index
    %40 = vector.load %arg9[%c0_46, %c122] : memref<16x512xbf16, #tpu.memory_space<vmem>>, vector<16x256xbf16>
    %c272 = arith.constant 272 : index
    %c0_47 = arith.constant 0 : index
    %41 = vector.load %arg10[%c272, %c0_47] : memref<432x256xbf16, #tpu.memory_space<vmem>>, vector<16x256xbf16>
    tpu.vector_store %arg10[%c272, %c0_47], %40 {strides = array<i32>} : memref<432x256xbf16, #tpu.memory_space<vmem>>, vector<16x256xbf16>,
    %c0_48 = arith.constant 0 : index
    %c200 = arith.constant 200 : index
    %42 = vector.load %arg9[%c0_48, %c200] : memref<16x512xbf16, #tpu.memory_space<vmem>>, vector<16x256xbf16>
    %c288 = arith.constant 288 : index
    %c0_49 = arith.constant 0 : index
    %43 = vector.load %arg10[%c288, %c0_49] : memref<432x256xbf16, #tpu.memory_space<vmem>>, vector<16x256xbf16>
    tpu.vector_store %arg10[%c288, %c0_49], %42 {strides = array<i32>} : memref<432x256xbf16, #tpu.memory_space<vmem>>, vector<16x256xbf16>,
    %c0_50 = arith.constant 0 : index
    %c201 = arith.constant 201 : index
    %44 = vector.load %arg9[%c0_50, %c201] : memref<16x512xbf16, #tpu.memory_space<vmem>>, vector<16x256xbf16>
    %c304 = arith.constant 304 : index
    %c0_51 = arith.constant 0 : index
    %45 = vector.load %arg10[%c304, %c0_51] : memref<432x256xbf16, #tpu.memory_space<vmem>>, vector<16x256xbf16>
    tpu.vector_store %arg10[%c304, %c0_51], %44 {strides = array<i32>} : memref<432x256xbf16, #tpu.memory_space<vmem>>, vector<16x256xbf16>,
    %c0_52 = arith.constant 0 : index
    %c202 = arith.constant 202 : index
    %46 = vector.load %arg9[%c0_52, %c202] : memref<16x512xbf16, #tpu.memory_space<vmem>>, vector<16x256xbf16>
    %c320 = arith.constant 320 : index
    %c0_53 = arith.constant 0 : index
    %47 = vector.load %arg10[%c320, %c0_53] : memref<432x256xbf16, #tpu.memory_space<vmem>>, vector<16x256xbf16>
    tpu.vector_store %arg10[%c320, %c0_53], %46 {strides = array<i32>} : memref<432x256xbf16, #tpu.memory_space<vmem>>, vector<16x256xbf16>,
    %c0_54 = arith.constant 0 : index
    %c210 = arith.constant 210 : index
    %48 = vector.load %arg9[%c0_54, %c210] : memref<16x512xbf16, #tpu.memory_space<vmem>>, vector<16x256xbf16>
    %c336 = arith.constant 336 : index
    %c0_55 = arith.constant 0 : index
    %49 = vector.load %arg10[%c336, %c0_55] : memref<432x256xbf16, #tpu.memory_space<vmem>>, vector<16x256xbf16>
    tpu.vector_store %arg10[%c336, %c0_55], %48 {strides = array<i32>} : memref<432x256xbf16, #tpu.memory_space<vmem>>, vector<16x256xbf16>,
    %c0_56 = arith.constant 0 : index
    %c211 = arith.constant 211 : index
    %50 = vector.load %arg9[%c0_56, %c211] : memref<16x512xbf16, #tpu.memory_space<vmem>>, vector<16x256xbf16>
    %c352 = arith.constant 352 : index
    %c0_57 = arith.constant 0 : index
    %51 = vector.load %arg10[%c352, %c0_57] : memref<432x256xbf16, #tpu.memory_space<vmem>>, vector<16x256xbf16>
    tpu.vector_store %arg10[%c352, %c0_57], %50 {strides = array<i32>} : memref<432x256xbf16, #tpu.memory_space<vmem>>, vector<16x256xbf16>,
    %c0_58 = arith.constant 0 : index
    %c212 = arith.constant 212 : index
    %52 = vector.load %arg9[%c0_58, %c212] : memref<16x512xbf16, #tpu.memory_space<vmem>>, vector<16x256xbf16>
    %c368 = arith.constant 368 : index
    %c0_59 = arith.constant 0 : index
    %53 = vector.load %arg10[%c368, %c0_59] : memref<432x256xbf16, #tpu.memory_space<vmem>>, vector<16x256xbf16>
    tpu.vector_store %arg10[%c368, %c0_59], %52 {strides = array<i32>} : memref<432x256xbf16, #tpu.memory_space<vmem>>, vector<16x256xbf16>,
    %c0_60 = arith.constant 0 : index
    %c220 = arith.constant 220 : index
    %54 = vector.load %arg9[%c0_60, %c220] : memref<16x512xbf16, #tpu.memory_space<vmem>>, vector<16x256xbf16>
    %c384 = arith.constant 384 : index
    %c0_61 = arith.constant 0 : index
    %55 = vector.load %arg10[%c384, %c0_61] : memref<432x256xbf16, #tpu.memory_space<vmem>>, vector<16x256xbf16>
    tpu.vector_store %arg10[%c384, %c0_61], %54 {strides = array<i32>} : memref<432x256xbf16, #tpu.memory_space<vmem>>, vector<16x256xbf16>,
    %c0_62 = arith.constant 0 : index
    %c221 = arith.constant 221 : index
    %56 = vector.load %arg9[%c0_62, %c221] : memref<16x512xbf16, #tpu.memory_space<vmem>>, vector<16x256xbf16>
    %c400 = arith.constant 400 : index
    %c0_63 = arith.constant 0 : index
    %57 = vector.load %arg10[%c400, %c0_63] : memref<432x256xbf16, #tpu.memory_space<vmem>>, vector<16x256xbf16>
    tpu.vector_store %arg10[%c400, %c0_63], %56 {strides = array<i32>} : memref<432x256xbf16, #tpu.memory_space<vmem>>, vector<16x256xbf16>,
    %c0_64 = arith.constant 0 : index
    %c222 = arith.constant 222 : index
    %58 = vector.load %arg9[%c0_64, %c222] : memref<16x512xbf16, #tpu.memory_space<vmem>>, vector<16x256xbf16>
    %c416 = arith.constant 416 : index
    %c0_65 = arith.constant 0 : index
    %59 = vector.load %arg10[%c416, %c0_65] : memref<432x256xbf16, #tpu.memory_space<vmem>>, vector<16x256xbf16>
    tpu.vector_store %arg10[%c416, %c0_65], %58 {strides = array<i32>} : memref<432x256xbf16, #tpu.memory_space<vmem>>, vector<16x256xbf16>,
    %c0_66 = arith.constant 0 : index
    %c0_67 = arith.constant 0 : index
    %60 = vector.load %arg4[%c0_66, %c0_67] : memref<8x432xbf16, #tpu.memory_space<vmem>>, vector<8x432xbf16>
    %c0_68 = arith.constant 0 : index
    %c0_69 = arith.constant 0 : index
    %61 = vector.load %arg10[%c0_68, %c0_69] : memref<432x256xbf16, #tpu.memory_space<vmem>>, vector<432x256xbf16>
    %cst = arith.constant dense<0.000000e+00> : vector<8x256xf32>
    %62 = tpu.matmul %60, %61, %cst {dimension_numbers = #tpu.dot_dimension_numbers<[1], [0], [0], [1], [0, 0, 1, 1], [], []>} : vector<8x432xbf16>, vector<432x256xbf16>, vector<8x256xf32> -> vector<8x256xf32>
    %c0_70 = arith.constant 0 : index
    %c0_71 = arith.constant 0 : index
    %63 = vector.load %arg5[%c0_70, %c0_71] : memref<8x1xf32, #tpu.memory_space<vmem>>, vector<8x1xf32>
    %64 = vector.broadcast %63 : vector<8x1xf32> to vector<8x256xf32>
    %65 = arith.addf %62, %64 : vector<8x256xf32>
    %66 = arith.truncf %65 : vector<8x256xf32> to vector<8x256xbf16>
    %c0_72 = arith.constant 0 : index
    %c0_73 = arith.constant 0 : index
    %c0_74 = arith.constant 0 : index
    %67 = vector.load %arg7[%c0_72, %c0_73, %c0_74] : memref<1x8x256xbf16, #tpu.memory_space<vmem>>, vector<1x8x256xbf16>
    %68 = vector.shape_cast %67 : vector<1x8x256xbf16> to vector<8x256xbf16>
    %69 = vector.shape_cast %66 : vector<8x256xbf16> to vector<1x8x256xbf16>
    tpu.vector_store %arg7[%c0_72, %c0_73, %c0_74], %69 {strides = array<i32>} : memref<1x8x256xbf16, #tpu.memory_space<vmem>>, vector<1x8x256xbf16>,
    %c0_75 = arith.constant 0 : index
    %c0_76 = arith.constant 0 : index
    %70 = vector.load %arg6[%c0_75, %c0_76] : memref<1x256xf32, #tpu.memory_space<vmem>>, vector<1x256xf32>
    %71 = vector.broadcast %70 : vector<1x256xf32> to vector<8x256xf32>
    %72 = arith.mulf %65, %71 : vector<8x256xf32>
    %73 = vector.shape_cast %72 : vector<8x256xf32> to vector<1x8x256xf32>
    %cst_77 = arith.constant dense<0.000000e+00> : vector<1xf32>
    %74 = vector.multi_reduction <add>, %73, %cst_77 [1, 2] : vector<1x8x256xf32> to vector<1xf32>
    %75 = vector.shape_cast %74 : vector<1xf32> to vector<1x1x1xf32>
    %76 = vector.extract %75[0, 0, 0] : f32 from vector<1x1x1xf32>
    %77 = vector.shape_cast %70 : vector<1x256xf32> to vector<1x1x256xf32>
    %cst_78 = arith.constant dense<0.000000e+00> : vector<1xf32>
    %78 = vector.multi_reduction <add>, %77, %cst_78 [1, 2] : vector<1x1x256xf32> to vector<1xf32>
    %79 = vector.shape_cast %78 : vector<1xf32> to vector<1x1x1xf32>
    %80 = vector.extract %79[0, 0, 0] : f32 from vector<1x1x1xf32>
    %cst_79 = arith.constant 8.000000e+00 : f32
    %81 = arith.mulf %80, %cst_79 : f32
    %cst_80 = arith.constant 0.000000e+00 : f32
    %82 = arith.cmpf ogt, %81, %cst_80 : f32
    %cst_81 = arith.constant 1.000000e+00 : f32
    %83 = arith.maximumf %81, %cst_81 : f32
    %84 = arith.divf %76, %83 : f32
    %cst_82 = arith.constant 0.000000e+00 : f32
    %85 = arith.select %82, %84, %cst_82 : f32
    %86 = vector.broadcast %85 : f32 to vector<8x256xf32>
    %87 = arith.subf %65, %86 : vector<8x256xf32>
    %88 = arith.mulf %87, %87 : vector<8x256xf32>
    %89 = vector.broadcast %70 : vector<1x256xf32> to vector<8x256xf32>
    %90 = arith.mulf %88, %89 : vector<8x256xf32>
    %91 = vector.shape_cast %90 : vector<8x256xf32> to vector<1x8x256xf32>
    %cst_83 = arith.constant dense<0.000000e+00> : vector<1xf32>
    %92 = vector.multi_reduction <add>, %91, %cst_83 [1, 2] : vector<1x8x256xf32> to vector<1xf32>
    %93 = vector.shape_cast %92 : vector<1xf32> to vector<1x1x1xf32>
    %94 = vector.extract %93[0, 0, 0] : f32 from vector<1x1x1xf32>
    %95 = tpu.iota {dimensions = array<i32: 0>} : vector<8x128xi32>
    %c0_i32 = arith.constant 0 : i32
    %96 = vector.broadcast %c0_i32 : i32 to vector<8x128xi32>
    %97 = arith.cmpi eq, %95, %96 : vector<8x128xi32>
    %c1_i32 = arith.constant 1 : i32
    %98 = vector.broadcast %c1_i32 : i32 to vector<8x128xi32>
    %99 = arith.cmpi eq, %95, %98 : vector<8x128xi32>
    %c2_i32 = arith.constant 2 : i32
    %100 = vector.broadcast %c2_i32 : i32 to vector<8x128xi32>
    %101 = arith.cmpi eq, %95, %100 : vector<8x128xi32>
    %cst_84 = arith.constant 0.000000e+00 : f32
    %102 = vector.broadcast %81 : f32 to vector<8x128xf32>
    %103 = vector.broadcast %cst_84 : f32 to vector<8x128xf32>
    %104 = arith.select %101, %102, %103 : vector<8x128xi1>, vector<8x128xf32>
    %105 = vector.broadcast %94 : f32 to vector<8x128xf32>
    %106 = arith.select %99, %105, %104 : vector<8x128xi1>, vector<8x128xf32>
    %107 = vector.broadcast %76 : f32 to vector<8x128xf32>
    %108 = arith.select %97, %107, %106 : vector<8x128xi1>, vector<8x128xf32>
    %c0_85 = arith.constant 0 : index
    %c0_86 = arith.constant 0 : index
    %c0_87 = arith.constant 0 : index
    %c0_88 = arith.constant 0 : index
    %109 = vector.load %arg8[%c0_85, %c0_86, %c0_87, %c0_88] : memref<1x1x8x128xf32, #tpu.memory_space<vmem>>, vector<1x1x8x128xf32>
    %110 = vector.shape_cast %109 : vector<1x1x8x128xf32> to vector<8x128xf32>
    %111 = vector.shape_cast %108 : vector<8x128xf32> to vector<1x1x8x128xf32>
    tpu.vector_store %arg8[%c0_85, %c0_86, %c0_87, %c0_88], %111 {strides = array<i32>} : memref<1x1x8x128xf32, #tpu.memory_space<vmem>>, vector<1x1x8x128xf32>,
    return
  }
  func.func @transform_0(%arg0: i32, %arg1: i32) -> (i32, i32, i32) {
    %c0_i32 = arith.constant 0 : i32
    %c0_i32_0 = arith.constant 0 : i32
    return %arg0, %c0_i32, %arg1 : i32, i32, i32
  }
  func.func @transform_1(%arg0: i32, %arg1: i32) -> (i32, i32, i32) {
    %c1_i32 = arith.constant 1 : i32
    %0 = arith.addi %arg1, %c1_i32 : i32
    %c1_i32_0 = arith.constant 1 : i32
    %1 = arith.muli %0, %c1_i32_0 : i32
    %c0_i32 = arith.constant 0 : i32
    %c0_i32_1 = arith.constant 0 : i32
    return %arg0, %c0_i32, %1 : i32, i32, i32
  }
  func.func @transform_2(%arg0: i32, %arg1: i32) -> (i32, i32) {
    %c0_i32 = arith.constant 0 : i32
    %c0_i32_0 = arith.constant 0 : i32
    %c0_i32_1 = arith.constant 0 : i32
    return %c0_i32, %c0_i32_0 : i32, i32
  }
  func.func @transform_3(%arg0: i32, %arg1: i32) -> (i32, i32) {
    %c0_i32 = arith.constant 0 : i32
    %c0_i32_0 = arith.constant 0 : i32
    %c0_i32_1 = arith.constant 0 : i32
    return %c0_i32, %c0_i32_0 : i32, i32
  }
  func.func @transform_4(%arg0: i32, %arg1: i32) -> (i32, i32) {
    %c0_i32 = arith.constant 0 : i32
    %c0_i32_0 = arith.constant 0 : i32
    return %c0_i32, %arg1 : i32, i32
  }
  func.func @transform_5(%arg0: i32, %arg1: i32) -> (i32, i32, i32) {
    %c0_i32 = arith.constant 0 : i32
    %c0_i32_0 = arith.constant 0 : i32
    return %arg0, %c0_i32, %arg1 : i32, i32, i32
  }
  func.func @transform_6(%arg0: i32, %arg1: i32) -> (i32, i32, i32, i32) {
    %c0_i32 = arith.constant 0 : i32
    %c0_i32_0 = arith.constant 0 : i32
    %c0_i32_1 = arith.constant 0 : i32
    return %arg0, %arg1, %c0_i32, %c0_i32_0 : i32, i32, i32, i32
  }
}

</mosaic_0001>

<llo_original>
// kernel: tpu_custom_call.1
$region0: #{tpu_custom_call.1}
  #allocation0 [shape = 'u32[]', space=smem, size = 0x4, offset = 0x4, fixed_abs, tag = 'smem constant byte address 0x4 - core index']
  #allocation1 [shape = 'u32[144,128]{1,0:T(1,128)}', space=vmem, size = 0x12000, scoped, tag = 'internal scratch']
  #allocation2 [shape = 'bf16[16,512]{1,0:T(16,128)(2,1)}', space=vmem, size = 0x4000, scoped, tag = 'scratch operand']
  #allocation3 [shape = 'bf16[432,256]{1,0:T(16,128)(2,1)}', space=vmem, size = 0x36000, scoped, tag = 'scratch operand']
  %s0 = inlined_call_operand.hbm [shape: bf16[2,16,1280], index: 0, kind: input, shape index: {}]
  %s1 = inlined_call_operand.hbm [shape: bf16[2,16,1280], index: 1, kind: input, shape index: {}]
  %s2 = inlined_call_operand.vmem [shape: bf16[8,432], index: 2, kind: input, shape index: {}]
  %s3 = inlined_call_operand.vmem [shape: f32[8,1], index: 3, kind: input, shape index: {}]
  %s4 = inlined_call_operand.vmem [shape: f32[1,1024], index: 4, kind: input, shape index: {}]
  %s5 = inlined_call_operand.hbm [shape: bf16[2,8,1024], index: 5, kind: output, shape index: {0}]
  %s6 = inlined_call_operand.hbm [shape: f32[2,4,8,128], index: 6, kind: output, shape index: {1}]
  %7 = xla_tuple %s5, %s6
  %s8 = sld [smem:[#allocation0]]
  $region69: #{tpu_custom_call.1} parent=0
    _
  %s10 = ssub.s32 1, %s8
  %s11 = scalar_select 0, %s10, %s8
  $region1: #{tpu_custom_call.1} parent=0
    #allocation4 [shape = 'u8[16384]{0}', space=vmem, size = 0x4000, scoped, tag = 'input window, operand 0']
    #allocation5 [shape = 's32[2]{0}', space=sflag, size = 0x8, scoped, tag = 'scoped memory for tpu_custom_call.1']
    #allocation6 [shape = 's32[2]{0}', space=sflag, size = 0x8, scoped, tag = 'scoped memory for tpu_custom_call.1']
    #allocation7 [shape = 'u8[16384]{0}', space=vmem, size = 0x4000, scoped, tag = 'input window, operand 1']
    #allocation8 [shape = 's32[2]{0}', space=sflag, size = 0x8, scoped, tag = 'scoped memory for tpu_custom_call.1']
    #allocation9 [shape = 'u8[8192]{0}', space=vmem, size = 0x2000, scoped, tag = 'output window, operand 0']
    #allocation10 [shape = 'u8[8192]{0}', space=vmem, size = 0x2000, scoped, tag = 'output window, operand 1']
    #allocation11 [shape = 's32[2]{0}', space=sflag, size = 0x8, scoped, tag = 'scoped memory for tpu_custom_call.1']
    %12 = vsyncpa [#allocation5], 0
    %s13 = scalar_lea.sflag [#allocation5], 1
    %14 = vsyncpa %s13, 0
    %15 = vsyncpa [#allocation8], 0
    %s16 = scalar_lea.sflag [#allocation8], 1
    %17 = vsyncpa %s16, 0
    %18 = vsyncpa [#allocation6], 0
    %s19 = scalar_lea.sflag [#allocation6], 1
    %20 = vsyncpa %s19, 0
    %21 = vsyncpa [#allocation11], 0
    %s22 = scalar_lea.sflag [#allocation11], 1
    %23 = vsyncpa %s22, 0
    loop: start=0, step=1, limit=10
    $region2: #{tpu_custom_call.1} parent=1 // loop_pre_header
      _
    $region3: #{tpu_custom_call.1} parent=1 // loop_header
      %s25 = sphi 0, %s29
      %p26 = scmp.ge.s32.totalorder %s25, 10
      %s32 = sphi 0, %s44
      %s33 = sphi 0, %s40
      %s34 = sphi 0, %s32
      %s35 = sphi 0, %s33
      %s36 = sphi 0, %s34
      %s37 = sphi 0, %s35
      %s49 = sphi 0, %s51
      %s52 = sphi 0, %s49
      %s53 = sphi 0, %s52
      %s69 = sphi 0, %s53
      %s79 = sphi 0, %s81
      %s82 = sphi 0, %s79
      %s83 = sphi 0, %s82
      %s99 = sphi 0, %s83
      %s103 = sphi 0, %s103
      %s105 = sphi 0, %s103
      %s106 = sphi 0, %s105
      %s120 = sphi 0, %s106
      %s124 = sphi 0, %s124
      %s126 = sphi 0, %s124
      %s127 = sphi 0, %s126
      %s141 = sphi 0, %s127
      %s147 = sphi 0, %s149
      %s150 = sphi 0, %s147
      %s151 = sphi 0, %s150
      %s167 = sphi 0, %s151
      %s175 = sphi 0, %s177
      %s178 = sphi 0, %s175
      %s179 = sphi 0, %s178
      %s195 = sphi 0, %s179
      %s203 = sphi 0, %s205
      %s206 = sphi 0, %s203
      %s207 = sphi 0, %s206
      %s223 = sphi 0, %s207
    $region4: #{tpu_custom_call.1} parent=1 // loop_header_branch
      %28 = sbr.rel (%p26) target = $region8
    $region5: #{tpu_custom_call.1} parent=1 // loop_body
      %s30 = ssub.s32 %s25, 1
      %s31 = ssub.s32 %s25, 2
      %s38 = sadd.s32 1, %s33
      %p39 = scmp.ge.s32.totalorder %s38, 4
      %s40 = scalar_select %p39, 0, %s38
      %s41 = sadd.s32 1, %s32
      %s42 = scalar_select %p39, %s41, %s32
      %p43 = scmp.ge.s32.totalorder %s42, 2
      %s44 = scalar_select %p43, 0, %s42
      %s45 = ssub.s32 %s32, %s44
      %s46 = ssub.s32 %s33, %s40
      %s47 = sor.u32 %s45, %s46
      %p48 = scmp.eq.s32.totalorder %s47, 0
      %s50 = sadd.s32 %s49, 1
      %s51 = scalar_select %p48, %s49, %s50
      %p54 = pneg %p48
      %p55 = scmp.eq.s32.totalorder %s25, 7
      %p56 = por %p54, %p55
      %p57 = scmp.ne.s32.totalorder %s49, %s52
      %p58 = scmp.eq.s32.totalorder %s25, 0
      %p59 = por %p57, %p58
      %p60 = scmp.ne.s32.totalorder %s49, %s52
      %p61 = scmp.eq.s32.totalorder %s30, 7
      %p62 = por %p60, %p61
      %p63 = scmp.ne.s32.totalorder %s52, %s53
      %p64 = scmp.eq.s32.totalorder %s30, 0
      %p65 = por %p63, %p64
      %p66 = scmp.ne.s32.totalorder %s52, %s53
      %p67 = scmp.eq.s32.totalorder %s31, 7
      %p68 = por %p66, %p67
      %p70 = scmp.ne.s32.totalorder %s53, %s69
      %p71 = scmp.eq.s32.totalorder %s31, 0
      %p72 = por %p70, %p71
      %s73 = sadd.s32 %s33, 1
      %s74 = sadd.s32 %s40, 1
      %s75 = ssub.s32 %s32, %s44
      %s76 = ssub.s32 %s73, %s74
      %s77 = sor.u32 %s75, %s76
      %p78 = scmp.eq.s32.totalorder %s77, 0
      %s80 = sadd.s32 %s79, 1
      %s81 = scalar_select %p78, %s79, %s80
      %p84 = pneg %p78
      %p85 = scmp.eq.s32.totalorder %s25, 7
      %p86 = por %p84, %p85
      %p87 = scmp.ne.s32.totalorder %s79, %s82
      %p88 = scmp.eq.s32.totalorder %s25, 0
      %p89 = por %p87, %p88
      %p90 = scmp.ne.s32.totalorder %s79, %s82
      %p91 = scmp.eq.s32.totalorder %s30, 7
      %p92 = por %p90, %p91
      %p93 = scmp.ne.s32.totalorder %s82, %s83
      %p94 = scmp.eq.s32.totalorder %s30, 0
      %p95 = por %p93, %p94
      %p96 = scmp.ne.s32.totalorder %s82, %s83
      %p97 = scmp.eq.s32.totalorder %s31, 7
      %p98 = por %p96, %p97
      %p100 = scmp.ne.s32.totalorder %s83, %s99
      %p101 = scmp.eq.s32.totalorder %s31, 0
      %p102 = por %p100, %p101
      %s104 = sadd.s32 %s103, 1
      %p107 = scmp.eq.s32.totalorder %s25, 7
      %p108 = scmp.ne.s32.totalorder %s103, %s105
      %p109 = scmp.eq.s32.totalorder %s25, 0
      %p110 = por %p108, %p109
      %p111 = scmp.ne.s32.totalorder %s103, %s105
      %p112 = scmp.eq.s32.totalorder %s30, 7
      %p113 = por %p111, %p112
      %p114 = scmp.ne.s32.totalorder %s105, %s106
      %p115 = scmp.eq.s32.totalorder %s30, 0
      %p116 = por %p114, %p115
      %p117 = scmp.ne.s32.totalorder %s105, %s106
      %p118 = scmp.eq.s32.totalorder %s31, 7
      %p119 = por %p117, %p118
      %p121 = scmp.ne.s32.totalorder %s106, %s120
      %p122 = scmp.eq.s32.totalorder %s31, 0
      %p123 = por %p121, %p122
      %s125 = sadd.s32 %s124, 1
      %p128 = scmp.eq.s32.totalorder %s25, 7
      %p129 = scmp.ne.s32.totalorder %s124, %s126
      %p130 = scmp.eq.s32.totalorder %s25, 0
      %p131 = por %p129, %p130
      %p132 = scmp.ne.s32.totalorder %s124, %s126
      %p133 = scmp.eq.s32.totalorder %s30, 7
      %p134 = por %p132, %p133
      %p135 = scmp.ne.s32.totalorder %s126, %s127
      %p136 = scmp.eq.s32.totalorder %s30, 0
      %p137 = por %p135, %p136
      %p138 = scmp.ne.s32.totalorder %s126, %s127
      %p139 = scmp.eq.s32.totalorder %s31, 7
      %p140 = por %p138, %p139
      %p142 = scmp.ne.s32.totalorder %s127, %s141
      %p143 = scmp.eq.s32.totalorder %s31, 0
      %p144 = por %p142, %p143
      %s145 = ssub.s32 %s33, %s40
      %p146 = scmp.eq.s32.totalorder %s145, 0
      %s148 = sadd.s32 %s147, 1
      %s149 = scalar_select %p146, %s147, %s148
      %p152 = pneg %p146
      %p153 = scmp.eq.s32.totalorder %s25, 7
      %p154 = por %p152, %p153
      %p155 = scmp.ne.s32.totalorder %s147, %s150
      %p156 = scmp.eq.s32.totalorder %s25, 0
      %p157 = por %p155, %p156
      %p158 = scmp.ne.s32.totalorder %s147, %s150
      %p159 = scmp.eq.s32.totalorder %s30, 7
      %p160 = por %p158, %p159
      %p161 = scmp.ne.s32.totalorder %s150, %s151
      %p162 = scmp.eq.s32.totalorder %s30, 0
      %p163 = por %p161, %p162
      %p164 = scmp.ne.s32.totalorder %s150, %s151
      %p165 = scmp.eq.s32.totalorder %s31, 7
      %p166 = por %p164, %p165
      %p168 = scmp.ne.s32.totalorder %s151, %s167
      %p169 = scmp.eq.s32.totalorder %s31, 0
      %p170 = por %p168, %p169
      %s171 = ssub.s32 %s32, %s44
      %s172 = ssub.s32 %s33, %s40
      %s173 = sor.u32 %s171, %s172
      %p174 = scmp.eq.s32.totalorder %s173, 0
      %s176 = sadd.s32 %s175, 1
      %s177 = scalar_select %p174, %s175, %s176
      %p180 = pneg %p174
      %p181 = scmp.eq.s32.totalorder %s25, 7
      %p182 = por %p180, %p181
      %p183 = scmp.ne.s32.totalorder %s175, %s178
      %p184 = scmp.eq.s32.totalorder %s25, 0
      %p185 = por %p183, %p184
      %p186 = scmp.ne.s32.totalorder %s175, %s178
      %p187 = scmp.eq.s32.totalorder %s30, 7
      %p188 = por %p186, %p187
      %p189 = scmp.ne.s32.totalorder %s178, %s179
      %p190 = scmp.eq.s32.totalorder %s30, 0
      %p191 = por %p189, %p190
      %p192 = scmp.ne.s32.totalorder %s178, %s179
      %p193 = scmp.eq.s32.totalorder %s31, 7
      %p194 = por %p192, %p193
      %p196 = scmp.ne.s32.totalorder %s179, %s195
      %p197 = scmp.eq.s32.totalorder %s31, 0
      %p198 = por %p196, %p197
      %s199 = ssub.s32 %s32, %s44
      %s200 = ssub.s32 %s33, %s40
      %s201 = sor.u32 %s199, %s200
      %p202 = scmp.eq.s32.totalorder %s201, 0
      %s204 = sadd.s32 %s203, 1
      %s205 = scalar_select %p202, %s203, %s204
      %p208 = pneg %p202
      %p209 = scmp.eq.s32.totalorder %s25, 7
      %p210 = por %p208, %p209
      %p211 = scmp.ne.s32.totalorder %s203, %s206
      %p212 = scmp.eq.s32.totalorder %s25, 0
      %p213 = por %p211, %p212
      %p214 = scmp.ne.s32.totalorder %s203, %s206
      %p215 = scmp.eq.s32.totalorder %s30, 7
      %p216 = por %p214, %p215
      %p217 = scmp.ne.s32.totalorder %s206, %s207
      %p218 = scmp.eq.s32.totalorder %s30, 0
      %p219 = por %p217, %p218
      %p220 = scmp.ne.s32.totalorder %s206, %s207
      %p221 = scmp.eq.s32.totalorder %s31, 7
      %p222 = por %p220, %p221
      %p224 = scmp.ne.s32.totalorder %s207, %s223
      %p225 = scmp.eq.s32.totalorder %s31, 0
      %p226 = por %p224, %p225
      %p227 = scmp.le.s32.totalorder 1, %s25
      %p228 = scmp.lt.s32.totalorder %s25, 9
      %p229 = pnand %p227, %p228
      %p230 = pneg %p229
      // Predicated region
      $region9: #{tpu_custom_call.1} parent=5 // pred_check
        _
      $region10: #{tpu_custom_call.1} parent=5 // pred_check_branch
        %232 = sbr.rel (%p229) target = $region12
      $region11: #{tpu_custom_call.1} parent=5 // pred_region
        %s233 = ssub.s32 %s25, 1
        // Predicated region
        $region13: #{tpu_custom_call.1} parent=11 // pred_check
          %p234 = pneg %p116
        $region14: #{tpu_custom_call.1} parent=11 // pred_check_branch
          %236 = sbr.rel (%p234) target = $region16
        $region15: #{tpu_custom_call.1} parent=11 // pred_region
          _
        $region16: #{tpu_custom_call.1} parent=11 // pred_fallthru
          _
        // Predicated region
        $region17: #{tpu_custom_call.1} parent=11 // pred_check
          %p237 = pneg %p137
        $region18: #{tpu_custom_call.1} parent=11 // pred_check_branch
          %239 = sbr.rel (%p237) target = $region20
        $region19: #{tpu_custom_call.1} parent=11 // pred_region
          _
        $region20: #{tpu_custom_call.1} parent=11 // pred_fallthru
          _
      $region12: #{tpu_custom_call.1} parent=5 // pred_fallthru
        _
      %p240 = scmp.lt.s32.totalorder %s25, 8
      // Predicated region
      $region21: #{tpu_custom_call.1} parent=5 // pred_check
        %p241 = pneg %p240
      $region22: #{tpu_custom_call.1} parent=5 // pred_check_branch
        %243 = sbr.rel (%p241) target = $region24
      $region23: #{tpu_custom_call.1} parent=5 // pred_region
        // Predicated region
        $region25: #{tpu_custom_call.1} parent=23 // pred_check
          %p244 = pneg %p59
        $region26: #{tpu_custom_call.1} parent=23 // pred_check_branch
          %246 = sbr.rel (%p244) target = $region28
        $region27: #{tpu_custom_call.1} parent=23 // pred_region
          %s247 = sand.u32 %s49, 1
          %s248 = scalar_lea.sflag [#allocation5], %s247
          %s249 = sand.u32 %s49, 1
          %s250 = smul.addr %s249, 16
          %s251 = scalar_lea.vmem [#allocation4], %s250
          %s252 = smul.u32 2, %s33
          %s254 = ssub.s32 256, 256
          %255 = vsyncadd %s248, %s254
          %s256 = smul.addr %s32, 20
          %s257 = sadd.s32 %s252, %s256
          %s258 = smul.addr %s257, 64
          %s259 = scalar_lea.hbm %s0, %s258
          %s260 = sshll.u32 %s251, 4
          %s261 = int_to_ptr.vmem [resolvable:$true] %s260
          %266 = dma.hbm_to_vmem [thread:$0]  %s259, 256, %s261, %s248, 640, 128, 8
        $region28: #{tpu_custom_call.1} parent=23 // pred_fallthru
          _
        // Predicated region
        $region29: #{tpu_custom_call.1} parent=23 // pred_check
          %p267 = pneg %p89
        $region30: #{tpu_custom_call.1} parent=23 // pred_check_branch
          %269 = sbr.rel (%p267) target = $region32
        $region31: #{tpu_custom_call.1} parent=23 // pred_region
          %s270 = sand.u32 %s79, 1
          %s271 = scalar_lea.sflag [#allocation8], %s270
          %s272 = sand.u32 %s79, 1
          %s273 = smul.addr %s272, 16
          %s274 = scalar_lea.vmem [#allocation7], %s273
          %s275 = sadd.s32 %s33, 1
          %s276 = smul.u32 2, %s275
          %s278 = ssub.s32 256, 256
          %279 = vsyncadd %s271, %s278
          %s280 = smul.addr %s32, 20
          %s281 = sadd.s32 %s276, %s280
          %s282 = smul.addr %s281, 64
          %s283 = scalar_lea.hbm %s1, %s282
          %s284 = sshll.u32 %s274, 4
          %s285 = int_to_ptr.vmem [resolvable:$true] %s284
          %290 = dma.hbm_to_vmem [thread:$0]  %s283, 256, %s285, %s271, 640, 128, 8
        $region32: #{tpu_custom_call.1} parent=23 // pred_fallthru
          _
        // Predicated region
        $region33: #{tpu_custom_call.1} parent=23 // pred_check
          %p291 = pneg %p157
        $region34: #{tpu_custom_call.1} parent=23 // pred_check_branch
          %293 = sbr.rel (%p291) target = $region36
        $region35: #{tpu_custom_call.1} parent=23 // pred_region
          %s294 = smul.u32 2, %s33
          %p295 = scmp.lt.s32.totalorder %s294, 7
          %s296 = scalar_select %p295, %s294, 7
          %s297 = scalar_lea.vmem %s4, %s296
          %s298 = smul.u32 2, %s33
        $region36: #{tpu_custom_call.1} parent=23 // pred_fallthru
          _
      $region24: #{tpu_custom_call.1} parent=5 // pred_fallthru
        _
      %p299 = scmp.le.s32.totalorder 1, %s25
      %p300 = scmp.lt.s32.totalorder %s25, 9
      %p301 = pnand %p299, %p300
      %p302 = pneg %p301
      // Predicated region
      $region37: #{tpu_custom_call.1} parent=5 // pred_check
        _
      $region38: #{tpu_custom_call.1} parent=5 // pred_check_branch
        %304 = sbr.rel (%p301) target = $region40
      $region39: #{tpu_custom_call.1} parent=5 // pred_region
        %s305 = ssub.s32 %s25, 1
        %s306 = sand.u32 %s52, 1
        %s307 = scalar_lea.sflag [#allocation5], %s306
        %s308 = sand.u32 %s52, 1
        %s309 = smul.addr %s308, 16
        %s310 = scalar_lea.vmem [#allocation4], %s309
        // Predicated region
        $region41: #{tpu_custom_call.1} parent=39 // pred_check
          %p311 = pneg %p65
        $region42: #{tpu_custom_call.1} parent=39 // pred_check_branch
          %313 = sbr.rel (%p311) target = $region44
        $region43: #{tpu_custom_call.1} parent=39 // pred_region
          %314 = dma.done %s307, 256
        $region44: #{tpu_custom_call.1} parent=39 // pred_fallthru
          _
        %s315 = sand.u32 %s82, 1
        %s316 = scalar_lea.sflag [#allocation8], %s315
        %s317 = sand.u32 %s82, 1
        %s318 = smul.addr %s317, 16
        %s319 = scalar_lea.vmem [#allocation7], %s318
        // Predicated region
        $region45: #{tpu_custom_call.1} parent=39 // pred_check
          %p320 = pneg %p95
        $region46: #{tpu_custom_call.1} parent=39 // pred_check_branch
          %322 = sbr.rel (%p320) target = $region48
        $region47: #{tpu_custom_call.1} parent=39 // pred_region
          %323 = dma.done %s316, 256
        $region48: #{tpu_custom_call.1} parent=39 // pred_fallthru
          _
        %s324 = sand.u32 %s52, 1
        %s325 = scalar_lea.sflag [#allocation5], %s324
        %s326 = sand.u32 %s52, 1
        %s327 = smul.addr %s326, 16
        %s328 = scalar_lea.vmem [#allocation4], %s327
        %p329 = pneg %p65
        %p330 = pneg %p62
        %s331 = sand.u32 %s82, 1
        %s332 = scalar_lea.sflag [#allocation8], %s331
        %s333 = sand.u32 %s82, 1
        %s334 = smul.addr %s333, 16
        %s335 = scalar_lea.vmem [#allocation7], %s334
        %p336 = pneg %p95
        %p337 = pneg %p92
        %p338 = pneg %p116
        %p339 = pneg %p113
        %p340 = pneg %p137
        %p341 = pneg %p134
        %s342 = smul.u32 2, %s35
        %p343 = scmp.lt.s32.totalorder %s342, 7
        %s344 = scalar_select %p343, %s342, 7
        %s345 = scalar_lea.vmem %s4, %s344
        %p346 = pneg %p163
        %p347 = pneg %p160
        %p348 = pneg %p191
        %p349 = pneg %p188
        %s350 = sand.u32 %s178, 1
        %s351 = scalar_lea.sflag [#allocation6], %s350
        %s352 = sand.u32 %s178, 1
        %s353 = smul.addr %s352, 8
        %s354 = scalar_lea.vmem [#allocation9], %s353
        %p355 = pneg %p219
        %p356 = pneg %p216
        %s357 = sand.u32 %s206, 1
        %s358 = scalar_lea.sflag [#allocation11], %s357
        %s359 = sand.u32 %s206, 1
        %s360 = smul.addr %s359, 8
        %s361 = scalar_lea.vmem [#allocation10], %s360
        %s362 = smul.u32 2, %s35
        %s363 = sadd.s32 %s35, 1
        %s364 = smul.u32 2, %s363
        %s365 = smul.u32 2, %s35
        %p366 = scmp.lt.s32.totalorder %s365, 7
        %s367 = scalar_select %p366, %s365, 7
        %s368 = scalar_lea.vmem %s4, %s367
        %s369 = smul.u32 2, %s35
        %s370 = smul.u32 2, %s35
        %v372 = vld [vmem:[%s310] sm:$0xff]
        %v373 = vld [vmem:[%s310 + $0x8] sm:$0xff]
        %v376 = vunpack.c.l.b16 %v372
        %v377 = vunpack.c.h.b16 %v372
        %v378 = vunpack.c.l.b16 %v373
        %v379 = vunpack.c.h.b16 %v373
        %v380 = vpack.c.b16 %v378, %v376
        %v381 = vpack.c.b16 %v379, %v377
        %384 = vst [vmem:[#allocation2] sm:$0xff] %v380
        %385 = vst [vmem:[#allocation2 + $0x8] sm:$0xff] %v381
        %v386 = vld [vmem:[%s319] sm:$0xff]
        %v387 = vld [vmem:[%s319 + $0x8] sm:$0xff]
        %v390 = vunpack.c.l.b16 %v386
        %v391 = vunpack.c.h.b16 %v386
        %v392 = vunpack.c.l.b16 %v387
        %v393 = vunpack.c.h.b16 %v387
        %v394 = vpack.c.b16 %v392, %v390
        %v395 = vpack.c.b16 %v393, %v391
        %398 = vst [vmem:[#allocation2 + $0x10] sm:$0xff] %v394
        %399 = vst [vmem:[#allocation2 + $0x18] sm:$0xff] %v395
        %v400 = vld [vmem:[#allocation2] sm:$0xff]
        %v401 = vld [vmem:[#allocation2 + $0x8] sm:$0xff]
        %402 = vst [vmem:[#allocation3] sm:$0xff] %v400
        %403 = vst [vmem:[#allocation3 + $0x8] sm:$0xff] %v401
        %v404 = vld [vmem:[#allocation2] sm:$0xff]
        %v405 = vld [vmem:[#allocation2 + $0x8] sm:$0xff]
        %v406 = vld [vmem:[#allocation2 + $0x10] sm:$0xff]
        %410 = vrot.lane.b32.xlu0 %v404, 127
        %v411 = vpop.permute.xlu0 %410
        %412 = vrot.lane.b32.xlu0 %v405, 127
        %v413 = vpop.permute.xlu0 %412
        %414 = vrot.lane.b32.xlu0 %v406, 127
        %v415 = vpop.permute.xlu0 %414
        %vm416 = vcmask 1039360
        %v417 = vsel %vm416, %v411, %v413
        %v418 = vsel %vm416, %v413, %v415
        %421 = vst [vmem:[#allocation3 + $0x10] sm:$0xff] %v417
        %422 = vst [vmem:[#allocation3 + $0x18] sm:$0xff] %v418
        %v423 = vld [vmem:[#allocation2] sm:$0xff]
        %v424 = vld [vmem:[#allocation2 + $0x8] sm:$0xff]
        %v425 = vld [vmem:[#allocation2 + $0x10] sm:$0xff]
        %429 = vrot.lane.b32.xlu0 %v423, 126
        %v430 = vpop.permute.xlu0 %429
        %431 = vrot.lane.b32.xlu0 %v424, 126
        %v432 = vpop.permute.xlu0 %431
        %433 = vrot.lane.b32.xlu0 %v425, 126
        %v434 = vpop.permute.xlu0 %433
        %vm435 = vcmask 1031168
        %v436 = vsel %vm435, %v430, %v432
        %v437 = vsel %vm435, %v432, %v434
        %440 = vst [vmem:[#allocation3 + $0x20] sm:$0xff] %v436
        %441 = vst [vmem:[#allocation3 + $0x28] sm:$0xff] %v437
        %v442 = vld [vmem:[#allocation2] sm:$0xff]
        %v443 = vld [vmem:[#allocation2 + $0x8] sm:$0xff]
        %v444 = vld [vmem:[#allocation2 + $0x10] sm:$0xff]
        %448 = vrot.lane.b32.xlu0 %v442, 118
        %v449 = vpop.permute.xlu0 %448
        %450 = vrot.lane.b32.xlu0 %v443, 118
        %v451 = vpop.permute.xlu0 %450
        %452 = vrot.lane.b32.xlu0 %v444, 118
        %v453 = vpop.permute.xlu0 %452
        %vm454 = vcmask 965632
        %v455 = vsel %vm454, %v449, %v451
        %v456 = vsel %vm454, %v451, %v453
        %459 = vst [vmem:[#allocation3 + $0x30] sm:$0xff] %v455
        %460 = vst [vmem:[#allocation3 + $0x38] sm:$0xff] %v456
        %v461 = vld [vmem:[#allocation2] sm:$0xff]
        %v462 = vld [vmem:[#allocation2 + $0x8] sm:$0xff]
        %v463 = vld [vmem:[#allocation2 + $0x10] sm:$0xff]
        %467 = vrot.lane.b32.xlu0 %v461, 117
        %v468 = vpop.permute.xlu0 %467
        %469 = vrot.lane.b32.xlu0 %v462, 117
        %v470 = vpop.permute.xlu0 %469
        %471 = vrot.lane.b32.xlu0 %v463, 117
        %v472 = vpop.permute.xlu0 %471
        %vm473 = vcmask 957440
        %v474 = vsel %vm473, %v468, %v470
        %v475 = vsel %vm473, %v470, %v472
        %478 = vst [vmem:[#allocation3 + $0x40] sm:$0xff] %v474
        %479 = vst [vmem:[#allocation3 + $0x48] sm:$0xff] %v475
        %v480 = vld [vmem:[#allocation2] sm:$0xff]
        %v481 = vld [vmem:[#allocation2 + $0x8] sm:$0xff]
        %v482 = vld [vmem:[#allocation2 + $0x10] sm:$0xff]
        %486 = vrot.lane.b32.xlu0 %v480, 116
        %v487 = vpop.permute.xlu0 %486
        %488 = vrot.lane.b32.xlu0 %v481, 116
        %v489 = vpop.permute.xlu0 %488
        %490 = vrot.lane.b32.xlu0 %v482, 116
        %v491 = vpop.permute.xlu0 %490
        %vm492 = vcmask 949248
        %v493 = vsel %vm492, %v487, %v489
        %v494 = vsel %vm492, %v489, %v491
        %497 = vst [vmem:[#allocation3 + $0x50] sm:$0xff] %v493
        %498 = vst [vmem:[#allocation3 + $0x58] sm:$0xff] %v494
        %v499 = vld [vmem:[#allocation2] sm:$0xff]
        %v500 = vld [vmem:[#allocation2 + $0x8] sm:$0xff]
        %v501 = vld [vmem:[#allocation2 + $0x10] sm:$0xff]
        %505 = vrot.lane.b32.xlu0 %v499, 108
        %v506 = vpop.permute.xlu0 %505
        %507 = vrot.lane.b32.xlu0 %v500, 108
        %v508 = vpop.permute.xlu0 %507
        %509 = vrot.lane.b32.xlu0 %v501, 108
        %v510 = vpop.permute.xlu0 %509
        %vm511 = vcmask 883712
        %v512 = vsel %vm511, %v506, %v508
        %v513 = vsel %vm511, %v508, %v510
        %516 = vst [vmem:[#allocation3 + $0x60] sm:$0xff] %v512
        %517 = vst [vmem:[#allocation3 + $0x68] sm:$0xff] %v513
        %v518 = vld [vmem:[#allocation2] sm:$0xff]
        %v519 = vld [vmem:[#allocation2 + $0x8] sm:$0xff]
        %v520 = vld [vmem:[#allocation2 + $0x10] sm:$0xff]
        %524 = vrot.lane.b32.xlu0 %v518, 107
        %v525 = vpop.permute.xlu0 %524
        %526 = vrot.lane.b32.xlu0 %v519, 107
        %v527 = vpop.permute.xlu0 %526
        %528 = vrot.lane.b32.xlu0 %v520, 107
        %v529 = vpop.permute.xlu0 %528
        %vm530 = vcmask 875520
        %v531 = vsel %vm530, %v525, %v527
        %v532 = vsel %vm530, %v527, %v529
        %535 = vst [vmem:[#allocation3 + $0x70] sm:$0xff] %v531
        %536 = vst [vmem:[#allocation3 + $0x78] sm:$0xff] %v532
        %v537 = vld [vmem:[#allocation2] sm:$0xff]
        %v538 = vld [vmem:[#allocation2 + $0x8] sm:$0xff]
        %v539 = vld [vmem:[#allocation2 + $0x10] sm:$0xff]
        %543 = vrot.lane.b32.xlu0 %v537, 106
        %v544 = vpop.permute.xlu0 %543
        %545 = vrot.lane.b32.xlu0 %v538, 106
        %v546 = vpop.permute.xlu0 %545
        %547 = vrot.lane.b32.xlu0 %v539, 106
        %v548 = vpop.permute.xlu0 %547
        %vm549 = vcmask 867328
        %v550 = vsel %vm549, %v544, %v546
        %v551 = vsel %vm549, %v546, %v548
        %554 = vst [vmem:[#allocation3 + $0x80] sm:$0xff] %v550
        %555 = vst [vmem:[#allocation3 + $0x88] sm:$0xff] %v551
        %v556 = vld [vmem:[#allocation2] sm:$0xff]
        %v557 = vld [vmem:[#allocation2 + $0x8] sm:$0xff]
        %v558 = vld [vmem:[#allocation2 + $0x10] sm:$0xff]
        %562 = vrot.lane.b32.xlu0 %v556, 28
        %v563 = vpop.permute.xlu0 %562
        %564 = vrot.lane.b32.xlu0 %v557, 28
        %v565 = vpop.permute.xlu0 %564
        %566 = vrot.lane.b32.xlu0 %v558, 28
        %v567 = vpop.permute.xlu0 %566
        %vm568 = vcmask 228352
        %v569 = vsel %vm568, %v563, %v565
        %v570 = vsel %vm568, %v565, %v567
        %573 = vst [vmem:[#allocation3 + $0x90] sm:$0xff] %v569
        %574 = vst [vmem:[#allocation3 + $0x98] sm:$0xff] %v570
        %v575 = vld [vmem:[#allocation2] sm:$0xff]
        %v576 = vld [vmem:[#allocation2 + $0x8] sm:$0xff]
        %v577 = vld [vmem:[#allocation2 + $0x10] sm:$0xff]
        %581 = vrot.lane.b32.xlu0 %v575, 27
        %v582 = vpop.permute.xlu0 %581
        %583 = vrot.lane.b32.xlu0 %v576, 27
        %v584 = vpop.permute.xlu0 %583
        %585 = vrot.lane.b32.xlu0 %v577, 27
        %v586 = vpop.permute.xlu0 %585
        %vm587 = vcmask 220160
        %v588 = vsel %vm587, %v582, %v584
        %v589 = vsel %vm587, %v584, %v586
        %592 = vst [vmem:[#allocation3 + $0xa0] sm:$0xff] %v588
        %593 = vst [vmem:[#allocation3 + $0xa8] sm:$0xff] %v589
        %v594 = vld [vmem:[#allocation2] sm:$0xff]
        %v595 = vld [vmem:[#allocation2 + $0x8] sm:$0xff]
        %v596 = vld [vmem:[#allocation2 + $0x10] sm:$0xff]
        %600 = vrot.lane.b32.xlu0 %v594, 26
        %v601 = vpop.permute.xlu0 %600
        %602 = vrot.lane.b32.xlu0 %v595, 26
        %v603 = vpop.permute.xlu0 %602
        %604 = vrot.lane.b32.xlu0 %v596, 26
        %v605 = vpop.permute.xlu0 %604
        %vm606 = vcmask 211968
        %v607 = vsel %vm606, %v601, %v603
        %v608 = vsel %vm606, %v603, %v605
        %611 = vst [vmem:[#allocation3 + $0xb0] sm:$0xff] %v607
        %612 = vst [vmem:[#allocation3 + $0xb8] sm:$0xff] %v608
        %v613 = vld [vmem:[#allocation2] sm:$0xff]
        %v614 = vld [vmem:[#allocation2 + $0x8] sm:$0xff]
        %v615 = vld [vmem:[#allocation2 + $0x10] sm:$0xff]
        %619 = vrot.lane.b32.xlu0 %v613, 18
        %v620 = vpop.permute.xlu0 %619
        %621 = vrot.lane.b32.xlu0 %v614, 18
        %v622 = vpop.permute.xlu0 %621
        %623 = vrot.lane.b32.xlu0 %v615, 18
        %v624 = vpop.permute.xlu0 %623
        %vm625 = vcmask 146432
        %v626 = vsel %vm625, %v620, %v622
        %v627 = vsel %vm625, %v622, %v624
        %630 = vst [vmem:[#allocation3 + $0xc0] sm:$0xff] %v626
        %631 = vst [vmem:[#allocation3 + $0xc8] sm:$0xff] %v627
        %v632 = vld [vmem:[#allocation2] sm:$0xff]
        %v633 = vld [vmem:[#allocation2 + $0x8] sm:$0xff]
        %v634 = vld [vmem:[#allocation2 + $0x10] sm:$0xff]
        %638 = vrot.lane.b32.xlu0 %v632, 17
        %v639 = vpop.permute.xlu0 %638
        %640 = vrot.lane.b32.xlu0 %v633, 17
        %v641 = vpop.permute.xlu0 %640
        %642 = vrot.lane.b32.xlu0 %v634, 17
        %v643 = vpop.permute.xlu0 %642
        %vm644 = vcmask 138240
        %v645 = vsel %vm644, %v639, %v641
        %v646 = vsel %vm644, %v641, %v643
        %649 = vst [vmem:[#allocation3 + $0xd0] sm:$0xff] %v645
        %650 = vst [vmem:[#allocation3 + $0xd8] sm:$0xff] %v646
        %v651 = vld [vmem:[#allocation2] sm:$0xff]
        %v652 = vld [vmem:[#allocation2 + $0x8] sm:$0xff]
        %v653 = vld [vmem:[#allocation2 + $0x10] sm:$0xff]
        %657 = vrot.lane.b32.xlu0 %v651, 16
        %v658 = vpop.permute.xlu0 %657
        %659 = vrot.lane.b32.xlu0 %v652, 16
        %v660 = vpop.permute.xlu0 %659
        %661 = vrot.lane.b32.xlu0 %v653, 16
        %v662 = vpop.permute.xlu0 %661
        %vm663 = vcmask 130048
        %v664 = vsel %vm663, %v658, %v660
        %v665 = vsel %vm663, %v660, %v662
        %668 = vst [vmem:[#allocation3 + $0xe0] sm:$0xff] %v664
        %669 = vst [vmem:[#allocation3 + $0xe8] sm:$0xff] %v665
        %v670 = vld [vmem:[#allocation2] sm:$0xff]
        %v671 = vld [vmem:[#allocation2 + $0x8] sm:$0xff]
        %v672 = vld [vmem:[#allocation2 + $0x10] sm:$0xff]
        %676 = vrot.lane.b32.xlu0 %v670, 8
        %v677 = vpop.permute.xlu0 %676
        %678 = vrot.lane.b32.xlu0 %v671, 8
        %v679 = vpop.permute.xlu0 %678
        %680 = vrot.lane.b32.xlu0 %v672, 8
        %v681 = vpop.permute.xlu0 %680
        %vm682 = vcmask 64512
        %v683 = vsel %vm682, %v677, %v679
        %v684 = vsel %vm682, %v679, %v681
        %687 = vst [vmem:[#allocation3 + $0xf0] sm:$0xff] %v683
        %688 = vst [vmem:[#allocation3 + $0xf8] sm:$0xff] %v684
        %v689 = vld [vmem:[#allocation2] sm:$0xff]
        %v690 = vld [vmem:[#allocation2 + $0x8] sm:$0xff]
        %v691 = vld [vmem:[#allocation2 + $0x10] sm:$0xff]
        %695 = vrot.lane.b32.xlu0 %v689, 7
        %v696 = vpop.permute.xlu0 %695
        %697 = vrot.lane.b32.xlu0 %v690, 7
        %v698 = vpop.permute.xlu0 %697
        %699 = vrot.lane.b32.xlu0 %v691, 7
        %v700 = vpop.permute.xlu0 %699
        %vm701 = vcmask 56320
        %v702 = vsel %vm701, %v696, %v698
        %v703 = vsel %vm701, %v698, %v700
        %706 = vst [vmem:[#allocation3 + $0x100] sm:$0xff] %v702
        %707 = vst [vmem:[#allocation3 + $0x108] sm:$0xff] %v703
        %v708 = vld [vmem:[#allocation2] sm:$0xff]
        %v709 = vld [vmem:[#allocation2 + $0x8] sm:$0xff]
        %v710 = vld [vmem:[#allocation2 + $0x10] sm:$0xff]
        %714 = vrot.lane.b32.xlu0 %v708, 6
        %v715 = vpop.permute.xlu0 %714
        %716 = vrot.lane.b32.xlu0 %v709, 6
        %v717 = vpop.permute.xlu0 %716
        %718 = vrot.lane.b32.xlu0 %v710, 6
        %v719 = vpop.permute.xlu0 %718
        %vm720 = vcmask 48128
        %v721 = vsel %vm720, %v715, %v717
        %v722 = vsel %vm720, %v717, %v719
        %725 = vst [vmem:[#allocation3 + $0x110] sm:$0xff] %v721
        %726 = vst [vmem:[#allocation3 + $0x118] sm:$0xff] %v722
        %v727 = vld [vmem:[#allocation2 + $0x8] sm:$0xff]
        %v728 = vld [vmem:[#allocation2 + $0x10] sm:$0xff]
        %v729 = vld [vmem:[#allocation2 + $0x18] sm:$0xff]
        %733 = vrot.lane.b32.xlu0 %v727, 56
        %v734 = vpop.permute.xlu0 %733
        %735 = vrot.lane.b32.xlu0 %v728, 56
        %v736 = vpop.permute.xlu0 %735
        %737 = vrot.lane.b32.xlu0 %v729, 56
        %v738 = vpop.permute.xlu0 %737
        %vm739 = vcmask 457728
        %v740 = vsel %vm739, %v734, %v736
        %v741 = vsel %vm739, %v736, %v738
        %744 = vst [vmem:[#allocation3 + $0x120] sm:$0xff] %v740
        %745 = vst [vmem:[#allocation3 + $0x128] sm:$0xff] %v741
        %v746 = vld [vmem:[#allocation2 + $0x8] sm:$0xff]
        %v747 = vld [vmem:[#allocation2 + $0x10] sm:$0xff]
        %v748 = vld [vmem:[#allocation2 + $0x18] sm:$0xff]
        %752 = vrot.lane.b32.xlu0 %v746, 55
        %v753 = vpop.permute.xlu0 %752
        %754 = vrot.lane.b32.xlu0 %v747, 55
        %v755 = vpop.permute.xlu0 %754
        %756 = vrot.lane.b32.xlu0 %v748, 55
        %v757 = vpop.permute.xlu0 %756
        %vm758 = vcmask 449536
        %v759 = vsel %vm758, %v753, %v755
        %v760 = vsel %vm758, %v755, %v757
        %763 = vst [vmem:[#allocation3 + $0x130] sm:$0xff] %v759
        %764 = vst [vmem:[#allocation3 + $0x138] sm:$0xff] %v760
        %v765 = vld [vmem:[#allocation2 + $0x8] sm:$0xff]
        %v766 = vld [vmem:[#allocation2 + $0x10] sm:$0xff]
        %v767 = vld [vmem:[#allocation2 + $0x18] sm:$0xff]
        %771 = vrot.lane.b32.xlu0 %v765, 54
        %v772 = vpop.permute.xlu0 %771
        %773 = vrot.lane.b32.xlu0 %v766, 54
        %v774 = vpop.permute.xlu0 %773
        %775 = vrot.lane.b32.xlu0 %v767, 54
        %v776 = vpop.permute.xlu0 %775
        %vm777 = vcmask 441344
        %v778 = vsel %vm777, %v772, %v774
        %v779 = vsel %vm777, %v774, %v776
        %782 = vst [vmem:[#allocation3 + $0x140] sm:$0xff] %v778
        %783 = vst [vmem:[#allocation3 + $0x148] sm:$0xff] %v779
        %v784 = vld [vmem:[#allocation2 + $0x8] sm:$0xff]
        %v785 = vld [vmem:[#allocation2 + $0x10] sm:$0xff]
        %v786 = vld [vmem:[#allocation2 + $0x18] sm:$0xff]
        %790 = vrot.lane.b32.xlu0 %v784, 46
        %v791 = vpop.permute.xlu0 %790
        %792 = vrot.lane.b32.xlu0 %v785, 46
        %v793 = vpop.permute.xlu0 %792
        %794 = vrot.lane.b32.xlu0 %v786, 46
        %v795 = vpop.permute.xlu0 %794
        %vm796 = vcmask 375808
        %v797 = vsel %vm796, %v791, %v793
        %v798 = vsel %vm796, %v793, %v795
        %801 = vst [vmem:[#allocation3 + $0x150] sm:$0xff] %v797
        %802 = vst [vmem:[#allocation3 + $0x158] sm:$0xff] %v798
        %v803 = vld [vmem:[#allocation2 + $0x8] sm:$0xff]
        %v804 = vld [vmem:[#allocation2 + $0x10] sm:$0xff]
        %v805 = vld [vmem:[#allocation2 + $0x18] sm:$0xff]
        %809 = vrot.lane.b32.xlu0 %v803, 45
        %v810 = vpop.permute.xlu0 %809
        %811 = vrot.lane.b32.xlu0 %v804, 45
        %v812 = vpop.permute.xlu0 %811
        %813 = vrot.lane.b32.xlu0 %v805, 45
        %v814 = vpop.permute.xlu0 %813
        %vm815 = vcmask 367616
        %v816 = vsel %vm815, %v810, %v812
        %v817 = vsel %vm815, %v812, %v814
        %820 = vst [vmem:[#allocation3 + $0x160] sm:$0xff] %v816
        %821 = vst [vmem:[#allocation3 + $0x168] sm:$0xff] %v817
        %v822 = vld [vmem:[#allocation2 + $0x8] sm:$0xff]
        %v823 = vld [vmem:[#allocation2 + $0x10] sm:$0xff]
        %v824 = vld [vmem:[#allocation2 + $0x18] sm:$0xff]
        %828 = vrot.lane.b32.xlu0 %v822, 44
        %v829 = vpop.permute.xlu0 %828
        %830 = vrot.lane.b32.xlu0 %v823, 44
        %v831 = vpop.permute.xlu0 %830
        %832 = vrot.lane.b32.xlu0 %v824, 44
        %v833 = vpop.permute.xlu0 %832
        %vm834 = vcmask 359424
        %v835 = vsel %vm834, %v829, %v831
        %v836 = vsel %vm834, %v831, %v833
        %839 = vst [vmem:[#allocation3 + $0x170] sm:$0xff] %v835
        %840 = vst [vmem:[#allocation3 + $0x178] sm:$0xff] %v836
        %v841 = vld [vmem:[#allocation2 + $0x8] sm:$0xff]
        %v842 = vld [vmem:[#allocation2 + $0x10] sm:$0xff]
        %v843 = vld [vmem:[#allocation2 + $0x18] sm:$0xff]
        %847 = vrot.lane.b32.xlu0 %v841, 36
        %v848 = vpop.permute.xlu0 %847
        %849 = vrot.lane.b32.xlu0 %v842, 36
        %v850 = vpop.permute.xlu0 %849
        %851 = vrot.lane.b32.xlu0 %v843, 36
        %v852 = vpop.permute.xlu0 %851
        %vm853 = vcmask 293888
        %v854 = vsel %vm853, %v848, %v850
        %v855 = vsel %vm853, %v850, %v852
        %858 = vst [vmem:[#allocation3 + $0x180] sm:$0xff] %v854
        %859 = vst [vmem:[#allocation3 + $0x188] sm:$0xff] %v855
        %v860 = vld [vmem:[#allocation2 + $0x8] sm:$0xff]
        %v861 = vld [vmem:[#allocation2 + $0x10] sm:$0xff]
        %v862 = vld [vmem:[#allocation2 + $0x18] sm:$0xff]
        %866 = vrot.lane.b32.xlu0 %v860, 35
        %v867 = vpop.permute.xlu0 %866
        %868 = vrot.lane.b32.xlu0 %v861, 35
        %v869 = vpop.permute.xlu0 %868
        %870 = vrot.lane.b32.xlu0 %v862, 35
        %v871 = vpop.permute.xlu0 %870
        %vm872 = vcmask 285696
        %v873 = vsel %vm872, %v867, %v869
        %v874 = vsel %vm872, %v869, %v871
        %877 = vst [vmem:[#allocation3 + $0x190] sm:$0xff] %v873
        %878 = vst [vmem:[#allocation3 + $0x198] sm:$0xff] %v874
        %v879 = vld [vmem:[#allocation2 + $0x8] sm:$0xff]
        %v880 = vld [vmem:[#allocation2 + $0x10] sm:$0xff]
        %v881 = vld [vmem:[#allocation2 + $0x18] sm:$0xff]
        %885 = vrot.lane.b32.xlu0 %v879, 34
        %v886 = vpop.permute.xlu0 %885
        %887 = vrot.lane.b32.xlu0 %v880, 34
        %v888 = vpop.permute.xlu0 %887
        %889 = vrot.lane.b32.xlu0 %v881, 34
        %v890 = vpop.permute.xlu0 %889
        %vm891 = vcmask 277504
        %v892 = vsel %vm891, %v886, %v888
        %v893 = vsel %vm891, %v888, %v890
        %896 = vst [vmem:[#allocation3 + $0x1a0] sm:$0xff] %v892
        %897 = vst [vmem:[#allocation3 + $0x1a8] sm:$0xff] %v893
        %v898 = vld [vmem:[%s2] sm:$0xff]
        %v899 = vld [vmem:[%s2 + $0x8] sm:$0xff]
        %v900 = vld [vmem:[#allocation3] sm:$0xff]
        %v901 = vld [vmem:[#allocation3 + $0x8] sm:$0xff]
        %v902 = vld [vmem:[#allocation3 + $0x10] sm:$0xff]
        %v903 = vld [vmem:[#allocation3 + $0x18] sm:$0xff]
        %v904 = vld [vmem:[#allocation3 + $0x20] sm:$0xff]
        %v905 = vld [vmem:[#allocation3 + $0x28] sm:$0xff]
        %v906 = vld [vmem:[#allocation3 + $0x30] sm:$0xff]
        %v907 = vld [vmem:[#allocation3 + $0x38] sm:$0xff]
        %v908 = vld [vmem:[#allocation3 + $0x40] sm:$0xff]
        %v909 = vld [vmem:[#allocation3 + $0x48] sm:$0xff]
        %v910 = vld [vmem:[#allocation3 + $0x50] sm:$0xff]
        %v911 = vld [vmem:[#allocation3 + $0x58] sm:$0xff]
        %v912 = vld [vmem:[#allocation3 + $0x60] sm:$0xff]
        %v913 = vld [vmem:[#allocation3 + $0x68] sm:$0xff]
        %v914 = vld [vmem:[#allocation3 + $0x70] sm:$0xff]
        %v915 = vld [vmem:[#allocation3 + $0x78] sm:$0xff]
        %v916 = vld [vmem:[#allocation3 + $0x80] sm:$0xff]
        %v917 = vld [vmem:[#allocation3 + $0x88] sm:$0xff]
        %v918 = vld [vmem:[#allocation3 + $0x90] sm:$0xff]
        %v919 = vld [vmem:[#allocation3 + $0x98] sm:$0xff]
        %v920 = vld [vmem:[#allocation3 + $0xa0] sm:$0xff]
        %v921 = vld [vmem:[#allocation3 + $0xa8] sm:$0xff]
        %v922 = vld [vmem:[#allocation3 + $0xb0] sm:$0xff]
        %v923 = vld [vmem:[#allocation3 + $0xb8] sm:$0xff]
        %v924 = vld [vmem:[#allocation3 + $0xc0] sm:$0xff]
        %v925 = vld [vmem:[#allocation3 + $0xc8] sm:$0xff]
        %v926 = vld [vmem:[#allocation3 + $0xd0] sm:$0xff]
        %v927 = vld [vmem:[#allocation3 + $0xd8] sm:$0xff]
        %v928 = vld [vmem:[#allocation3 + $0xe0] sm:$0xff]
        %v929 = vld [vmem:[#allocation3 + $0xe8] sm:$0xff]
        %v930 = vld [vmem:[#allocation3 + $0xf0] sm:$0xff]
        %v931 = vld [vmem:[#allocation3 + $0xf8] sm:$0xff]
        %v932 = vld [vmem:[#allocation3 + $0x100] sm:$0xff]
        %v933 = vld [vmem:[#allocation3 + $0x108] sm:$0xff]
        %v934 = vld [vmem:[#allocation3 + $0x110] sm:$0xff]
        %v935 = vld [vmem:[#allocation3 + $0x118] sm:$0xff]
        %v936 = vld [vmem:[#allocation3 + $0x120] sm:$0xff]
        %v937 = vld [vmem:[#allocation3 + $0x128] sm:$0xff]
        %v938 = vld [vmem:[#allocation3 + $0x130] sm:$0xff]
        %v939 = vld [vmem:[#allocation3 + $0x138] sm:$0xff]
        %v940 = vld [vmem:[#allocation3 + $0x140] sm:$0xff]
        %v941 = vld [vmem:[#allocation3 + $0x148] sm:$0xff]
        %v942 = vld [vmem:[#allocation3 + $0x150] sm:$0xff]
        %v943 = vld [vmem:[#allocation3 + $0x158] sm:$0xff]
        %v944 = vld [vmem:[#allocation3 + $0x160] sm:$0xff]
        %v945 = vld [vmem:[#allocation3 + $0x168] sm:$0xff]
        %v946 = vld [vmem:[#allocation3 + $0x170] sm:$0xff]
        %v947 = vld [vmem:[#allocation3 + $0x178] sm:$0xff]
        %v948 = vld [vmem:[#allocation3 + $0x180] sm:$0xff]
        %v949 = vld [vmem:[#allocation3 + $0x188] sm:$0xff]
        %v950 = vld [vmem:[#allocation3 + $0x190] sm:$0xff]
        %v951 = vld [vmem:[#allocation3 + $0x198] sm:$0xff]
        %v952 = vld [vmem:[#allocation3 + $0x1a0] sm:$0xff]
        %v953 = vld [vmem:[#allocation3 + $0x1a8] sm:$0xff]
        %v954 = vld [vmem:[%s3] sm:$0xff]
        %956 = vset.pattern.permute.xlu0 0
        %957 = vperm.xlu0 %956, %v954
        %v958 = vpop.permute.xlu0 %957
        %v962 = vunpack.c.l.b16 %v898
        %v963 = vunpack.c.h.b16 %v898
        %v964 = vunpack.c.l.b16 %v899
        %v965 = vunpack.c.h.b16 %v899
        %v966 = vpack.c.b16 %v962, %v962
        %v967 = vpack.c.b16 %v963, %v963
        %v968 = vpack.c.b16 %v964, %v964
        %v969 = vpack.c.b16 %v965, %v965
        %vm973 = vcmask 392192
        %v975 = vsel %vm973, %v969, 0
        %977 = vmatprep.subr.bf16.mxu0 %v901
        %978 = vmatpush1.bf16.msra.mxu0 %v900
        %979 = vmatprep.subr.bf16.mxu0 %v903
        %980 = vmatpush1.bf16.msra.mxu0 %v902
        %981 = vmatprep.subr.bf16.mxu0 %v905
        %982 = vmatpush1.bf16.msra.mxu0 %v904
        %983 = vmatprep.subr.bf16.mxu0 %v907
        %984 = vmatpush1.bf16.msra.mxu0 %v906
        %985 = vmatprep.subr.bf16.mxu0 %v909
        %986 = vmatpush1.bf16.msra.mxu0 %v908
        %987 = vmatprep.subr.bf16.mxu0 %v911
        %988 = vmatpush1.bf16.msra.mxu0 %v910
        %989 = vmatprep.subr.bf16.mxu0 %v913
        %990 = vmatpush1.bf16.msra.mxu0 %v912
        %991 = vmatprep.subr.bf16.mxu0 %v915
        %992 = vmatpush1.bf16.msra.mxu0 %v914
        %993 = vmatprep.subr.bf16.mxu0 %v917
        %994 = vmatpush1.bf16.msra.mxu0 %v916
        %995 = vmatprep.subr.bf16.mxu0 %v919
        %996 = vmatpush1.bf16.msra.mxu0 %v918
        %997 = vmatprep.subr.bf16.mxu0 %v921
        %998 = vmatpush1.bf16.msra.mxu0 %v920
        %999 = vmatprep.subr.bf16.mxu0 %v923
        %1000 = vmatpush1.bf16.msra.mxu0 %v922
        %1001 = vmatprep.subr.bf16.mxu0 %v925
        %1002 = vmatpush1.bf16.msra.mxu0 %v924
        %1003 = vmatprep.subr.bf16.mxu0 %v927
        %1004 = vmatpush1.bf16.msra.mxu0 %v926
        %1005 = vmatprep.subr.bf16.mxu0 %v929
        %1006 = vmatpush1.bf16.msra.mxu0 %v928
        %1007 = vmatprep.subr.bf16.mxu0 %v931
        %1008 = vmatpush1.bf16.msra.mxu0 %v930
        %1009 = vmatprep.mubr.bf16.mxu0 %v967
        %1010 = vmatmul.mubr.bf16.gmra.mrb[0].mxu0 %v966
        %v1011 = vpop.f32.mrb[0].mxu0
        %v1012 = vadd.f32 %v958, %v1011
        %v1013 = vpop.f32.mrb[0].mxu0
        %v1014 = vadd.f32 %v958, %v1013
        %v1015 = vpop.f32.mrb[0].mxu0
        %v1016 = vpop.f32.mrb[0].mxu0
        %1017 = vdwg.mxu0
        %1018 = vmatprep.subr.bf16.mxu0 %v933
        %1019 = vmatpush1.bf16.msra.mxu0 %v932
        %1020 = vmatprep.subr.bf16.mxu0 %v935
        %1021 = vmatpush1.bf16.msra.mxu0 %v934
        %1022 = vmatprep.subr.bf16.mxu0 %v937
        %1023 = vmatpush1.bf16.msra.mxu0 %v936
        %1024 = vmatprep.subr.bf16.mxu0 %v939
        %1025 = vmatpush1.bf16.msra.mxu0 %v938
        %1026 = vmatprep.subr.bf16.mxu0 %v941
        %1027 = vmatpush1.bf16.msra.mxu0 %v940
        %1028 = vmatprep.subr.bf16.mxu0 %v943
        %1029 = vmatpush1.bf16.msra.mxu0 %v942
        %1030 = vmatprep.subr.bf16.mxu0 %v945
        %1031 = vmatpush1.bf16.msra.mxu0 %v944
        %1032 = vmatprep.subr.bf16.mxu0 %v947
        %1033 = vmatpush1.bf16.msra.mxu0 %v946
        %1034 = vmatprep.subr.bf16.mxu0 %v949
        %1035 = vmatpush1.bf16.msra.mxu0 %v948
        %1036 = vmatprep.subr.bf16.mxu0 %v951
        %1037 = vmatpush1.bf16.msra.mxu0 %v950
        %1038 = vmatprep.subr.bf16.mxu0 %v953
        %1039 = vmatpush1.bf16.msra.mxu0 %v952
        %1040 = vmatprep.subr.bf16.mxu0 0
        %1041 = vmatpush1.bf16.msra.mxu0 0
        %1042 = vmatprep.subr.bf16.mxu0 0
        %1043 = vmatpush1.bf16.msra.mxu0 0
        %1044 = vmatprep.subr.bf16.mxu0 0
        %1045 = vmatpush1.bf16.msra.mxu0 0
        %1046 = vmatprep.subr.bf16.mxu0 0
        %1047 = vmatpush1.bf16.msra.mxu0 0
        %1048 = vmatprep.subr.bf16.mxu0 0
        %1049 = vmatpush1.bf16.msra.mxu0 0
        %1050 = vmatprep.mubr.bf16.mxu0 %v975
        %1051 = vmatmul.mubr.bf16.gmra.mrb[0].mxu0 %v968
        %v1052 = vpop.f32.mrb[0].mxu0
        %v1053 = vadd.f32 %v1012, %v1052
        %v1054 = vpop.f32.mrb[0].mxu0
        %v1055 = vadd.f32 %v1014, %v1054
        %v1056 = vpop.f32.mrb[0].mxu0
        %v1057 = vpop.f32.mrb[0].mxu0
        %1058 = vdwg.mxu0
        %v1059 = vpack.c.bf16 %v1053, %v1053
        %v1060 = vpack.c.bf16 %v1055, %v1055
        %v1063 = vunpack.c.l.b16 %v1059
        %v1064 = vunpack.c.l.b16 %v1060
        %v1065 = vpack.c.b16 %v1064, %v1063
        %1067 = vst [vmem:[%s354] sm:$0xff] %v1065
        %v1068 = vld [vmem:[%s368] sm:$0x3]
        %v1070 = vlaneseq
        %v1071 = vshrl.u32 %v1070, 7
        %v1072 = vsub.s32 0, %v1071
        %v1073 = vrot.slane %v1068, %v1072
        %v1074 = vlaneseq
        %v1075 = vshrl.u32 %v1074, 7
        %v1076 = vsub.s32 1, %v1075
        %v1077 = vrot.slane %v1068, %v1076
        %v1080 = vmul.f32 %v1053, %v1073
        %v1081 = vmul.f32 %v1055, %v1077
        %v1082 = vadd.f32 %v1080, %v1081
        %1083 = vadd.xlane.f32.xlu0 %v1082
        %v1084 = vpop.xlane.xlu0 %1083
        %v1085 = vrot.slane %v1084, 4
        %v1086 = vadd.f32 %v1084, %v1085
        %v1087 = vrot.slane %v1086, 2
        %v1088 = vadd.f32 %v1086, %v1087
        %v1089 = vrot.slane %v1088, 1
        %v1090 = vadd.f32 %v1088, %v1089
        %s1091 = vtos %v1090
        %vm1092 = vcmask 1040384
        %v1093 = vsel %vm1092, %v1073, 0.0
        %v1094 = vsel %vm1092, %v1077, 0.0
        %v1095 = vadd.f32 %v1093, %v1094
        %1096 = vadd.xlane.f32.xlu0 %v1095
        %v1097 = vpop.xlane.xlu0 %1096
        %v1098 = vrot.slane %v1097, 4
        %v1099 = vadd.f32 %v1097, %v1098
        %v1100 = vrot.slane %v1099, 2
        %v1101 = vadd.f32 %v1099, %v1100
        %v1102 = vrot.slane %v1101, 1
        %v1103 = vadd.f32 %v1101, %v1102
        %s1104 = vtos %v1103
        %s1105 = smul.f32 %s1104, 8.0
        %p1106 = scmp.gt.f32.partialorder %s1105, 0.0
        %s1107 = smax.f32 %s1105, 1.0
        %v1108 = vstv %s1107
        %v1109 = vrcp.pop %v1108
        %s1110 = vtos %v1109
        %s1111 = smul.f32 %s1091, %s1110
        %s1112 = scalar_select %p1106, %s1111, 0.0
        %v1113 = vstv %s1112
        %v1114 = vsub.f32 %v1053, %v1113
        %v1115 = vsub.f32 %v1055, %v1113
        %v1116 = vmul.f32 %v1114, %v1114
        %v1117 = vmul.f32 %v1115, %v1115
        %v1118 = vmul.f32 %v1116, %v1073
        %v1119 = vmul.f32 %v1117, %v1077
        %v1120 = vadd.f32 %v1118, %v1119
        %1121 = vadd.xlane.f32.xlu0 %v1120
        %v1122 = vpop.xlane.xlu0 %1121
        %v1123 = vrot.slane %v1122, 4
        %v1124 = vadd.f32 %v1122, %v1123
        %v1125 = vrot.slane %v1124, 2
        %v1126 = vadd.f32 %v1124, %v1125
        %v1127 = vrot.slane %v1126, 1
        %v1128 = vadd.f32 %v1126, %v1127
        %s1129 = vtos %v1128
        %v1130 = vlaneseq
        %v1131 = vshrl.u32 %v1130, 7
        %vm1132 = vcmp.eq.s32.totalorder %v1131, 0
        %vm1133 = vcmp.eq.s32.totalorder %v1131, 1
        %vm1134 = vcmp.eq.s32.totalorder %v1131, 2
        %v1135 = vstv %s1105
        %v1136 = vsel %vm1134, %v1135, 0.0
        %v1137 = vstv %s1129
        %v1138 = vsel %vm1133, %v1137, %v1136
        %v1139 = vstv %s1091
        %v1140 = vsel %vm1132, %v1139, %v1138
        %1141 = vst [vmem:[%s361] sm:$0xff] %v1140
        %s1142 = sand.u32 %s178, 1
        %s1143 = scalar_lea.sflag [#allocation6], %s1142
        %s1144 = sand.u32 %s178, 1
        %s1145 = smul.addr %s1144, 8
        %s1146 = scalar_lea.vmem [#allocation9], %s1145
        %s1147 = sand.u32 %s206, 1
        %s1148 = scalar_lea.sflag [#allocation11], %s1147
        %s1149 = sand.u32 %s206, 1
        %s1150 = smul.addr %s1149, 8
        %s1151 = scalar_lea.vmem [#allocation10], %s1150
        // Predicated region
        $region49: #{tpu_custom_call.1} parent=39 // pred_check
          %p1152 = pneg %p188
        $region50: #{tpu_custom_call.1} parent=39 // pred_check_branch
          %1154 = sbr.rel (%p1152) target = $region52
        $region51: #{tpu_custom_call.1} parent=39 // pred_region
          %s1155 = smul.u32 2, %s35
          %s1157 = ssub.s32 128, 128
          %1158 = vsyncadd %s1143, %s1157
          %s1159 = smul.addr %s34, 8
          %s1160 = sadd.s32 %s1155, %s1159
          %s1161 = smul.addr %s1160, 64
          %s1162 = scalar_lea.hbm %s5, %s1161
          %s1164 = sshll.u32 %s1146, 4
          %s1165 = int_to_ptr.vmem [resolvable:$true] %s1164
          %1167 = dma.vmem_to_hbm [thread:$0]  %s1165, 128, %s1162, %s1143
        $region52: #{tpu_custom_call.1} parent=39 // pred_fallthru
          _
        // Predicated region
        $region53: #{tpu_custom_call.1} parent=39 // pred_check
          %p1168 = pneg %p216
        $region54: #{tpu_custom_call.1} parent=39 // pred_check_branch
          %1170 = sbr.rel (%p1168) target = $region56
        $region55: #{tpu_custom_call.1} parent=39 // pred_region
          %s1172 = ssub.s32 128, 128
          %1173 = vsyncadd %s1148, %s1172
          %s1174 = smul.addr %s34, 4
          %s1175 = sadd.s32 %s35, %s1174
          %s1176 = smul.addr %s1175, 128
          %s1177 = scalar_lea.hbm %s6, %s1176
          %s1179 = sshll.u32 %s1151, 4
          %s1180 = int_to_ptr.vmem [resolvable:$true] %s1179
          %1182 = dma.vmem_to_hbm [thread:$0]  %s1180, 128, %s1177, %s1148
        $region56: #{tpu_custom_call.1} parent=39 // pred_fallthru
          _
      $region40: #{tpu_custom_call.1} parent=5 // pred_fallthru
        _
      %p1183 = scmp.le.s32.totalorder 2, %s25
      // Predicated region
      $region57: #{tpu_custom_call.1} parent=5 // pred_check
        %p1184 = pneg %p1183
      $region58: #{tpu_custom_call.1} parent=5 // pred_check_branch
        %1186 = sbr.rel (%p1184) target = $region60
      $region59: #{tpu_custom_call.1} parent=5 // pred_region
        %s1187 = ssub.s32 %s25, 2
        // Predicated region
        $region61: #{tpu_custom_call.1} parent=59 // pred_check
          %p1188 = pneg %p194
        $region62: #{tpu_custom_call.1} parent=59 // pred_check_branch
          %1190 = sbr.rel (%p1188) target = $region64
        $region63: #{tpu_custom_call.1} parent=59 // pred_region
          %s1191 = sand.u32 %s179, 1
          %s1192 = scalar_lea.sflag [#allocation6], %s1191
          %s1193 = sand.u32 %s179, 1
          %s1194 = smul.addr %s1193, 8
          %s1195 = scalar_lea.vmem [#allocation9], %s1194
          %1196 = dma.done %s1192, 128
        $region64: #{tpu_custom_call.1} parent=59 // pred_fallthru
          _
        // Predicated region
        $region65: #{tpu_custom_call.1} parent=59 // pred_check
          %p1197 = pneg %p222
        $region66: #{tpu_custom_call.1} parent=59 // pred_check_branch
          %1199 = sbr.rel (%p1197) target = $region68
        $region67: #{tpu_custom_call.1} parent=59 // pred_region
          %s1200 = sand.u32 %s207, 1
          %s1201 = scalar_lea.sflag [#allocation11], %s1200
          %s1202 = sand.u32 %s207, 1
          %s1203 = smul.addr %s1202, 8
          %s1204 = scalar_lea.vmem [#allocation10], %s1203
          %1205 = dma.done %s1201, 128
        $region68: #{tpu_custom_call.1} parent=59 // pred_fallthru
          _
      $region60: #{tpu_custom_call.1} parent=5 // pred_fallthru
        _
    $region6: #{tpu_custom_call.1} parent=1 // loop_footer
      %s29 = sadd.s32 1, %s25
    $region7: #{tpu_custom_call.1} parent=1 // loop_footer_branch
      %24 = sbr.rel target = $region3
    $region8: #{tpu_custom_call.1} parent=1 // loop_exit
      _
    %1206 = vsyncpa [#allocation5], 1
    %s1207 = scalar_lea.sflag [#allocation5], 1
    %1208 = vsyncpa %s1207, 1
    %1209 = vsyncpa [#allocation8], 1
    %s1210 = scalar_lea.sflag [#allocation8], 1
    %1211 = vsyncpa %s1210, 1
    %1212 = vsyncpa [#allocation6], 1
    %s1213 = scalar_lea.sflag [#allocation6], 1
    %1214 = vsyncpa %s1213, 1
    %1215 = vsyncpa [#allocation11], 1
    %s1216 = scalar_lea.sflag [#allocation11], 1
    %1217 = vsyncpa %s1216, 1

</llo_original>
